<compile_context>
chip_gen: v7x
topology: tpu7x:2x2x1
jax: 0.10.0
libtpu: 0.0.40
codegen_flags: <defaults>
</compile_context>

<pallas_src>
import math
from functools import partial

import jax
import jax.numpy as jnp
import numpy as np
from jax.experimental import pallas as pl
from jax.experimental.pallas import tpu as pltpu  # noqa: F401  (TPU backend namespace)

# ---- module hyper-params (consistent with FilmLayerNetwork.__init__) ------------------
NUM_MAPS = 64        # num_maps
NUM_BLOCKS = 2       # num_blocks
Z_G_DIM = 32         # z_g_dim (task representation dim)
P = NUM_BLOCKS * 4   # processors per layer: [gamma1, beta1, gamma2, beta2] x num_blocks
F = P * NUM_MAPS     # fused feature width = 512

# advisory cost for XLA scheduling (latency-bound micro-kernel)
_FLOPS = 2 * (Z_G_DIM * NUM_MAPS + NUM_MAPS * F + 2 * F * F)
_BYTES = 4 * (Z_G_DIM                          # x
              + (Z_G_DIM + 1) * NUM_MAPS       # Wsh|bsh slab
              + (NUM_MAPS + 2 * F) * F         # W1cat|W2bd|W3bd slab
              + 5 * F                          # b1|b2|b3|reg|off row slab
              + F)                             # output


# ---------------------------- fused Pallas kernel -------------------------------------
def film_kernel(x_ref, wsh_ref, wbig_ref, rows_ref, out_ref):
    """shared Linear+ReLU + all P dense-residual processors + FiLM scale/offset."""
    f32 = jnp.float32

    # shared_layer: h = ReLU(x @ Wsh + bsh)                                  (1, 64)
    x = x_ref[...]
    wsh = wsh_ref[0:Z_G_DIM, :]
    bsh = wsh_ref[Z_G_DIM:Z_G_DIM + 1, :]
    h = jnp.maximum(jnp.dot(x, wsh, preferred_element_type=f32) + bsh, 0.0)

    # replicate h across the P lane groups once (cheap lane concat) for the residual
    h_rep = jnp.concatenate([h] * P, axis=1)                               # (1, 512)

    # packed weights: W1cat (64,512) | W2bd (512,512) | W3bd (512,512)
    w1 = wbig_ref[0:NUM_MAPS, :]
    w2 = wbig_ref[NUM_MAPS:NUM_MAPS + F, :]
    w3 = wbig_ref[NUM_MAPS + F:NUM_MAPS + 2 * F, :]

    b1 = rows_ref[0:1, :]
    b2 = rows_ref[1:2, :]
    b3 = rows_ref[2:3, :]
    reg = rows_ref[3:4, :]
    off = rows_ref[4:5, :]

    # Sequential(DenseResidual, ReLU, DenseResidual, ReLU, DenseResidual) for all
    # P processors at once; off-diagonal blocks of w2/w3 are exact zeros so the
    # processors remain independent.
    y1 = jnp.maximum(jnp.dot(h, w1, preferred_element_type=f32) + b1 + h_rep, 0.0)
    y2 = jnp.maximum(jnp.dot(y1, w2, preferred_element_type=f32) + b2 + y1, 0.0)
    y3 = jnp.dot(y2, w3, preferred_element_type=f32) + b3 + y2

    # FiLM: gamma = y*reg + 1, beta = y*reg + 0 (off holds the +1/+0 per lane group)
    out_ref[...] = y3 * reg + off                                          # (1, 512)


# ---------------------------- wrappers --------------------------------------------------
@jax.jit
def film_forward(kernel_params, x):
    """Single fused, grid-less pallas_call; everything VMEM-resident."""
    return pl.pallas_call(
        film_kernel,
        out_shape=jax.ShapeDtypeStruct((1, F), jnp.float32),
        cost_estimate=pl.CostEstimate(
            flops=_FLOPS, transcendentals=0, bytes_accessed=_BYTES),
    )(x, kernel_params['Wsh_aug'], kernel_params['Wbig'], kernel_params['rows'])


def film_layer_forward(kernel_params, x):
    """Returns (block_params, raw) mirroring FilmLayerNetwork.forward's list of dicts."""
    flat = film_forward(kernel_params, x)                  # (1, P*NUM_MAPS), lane-dense
    raw = flat.reshape(P, NUM_MAPS)
    names = ('gamma1', 'beta1', 'gamma2', 'beta2')
    block_params = [{names[t]: raw[b * 4 + t] for t in range(4)}
                    for b in range(NUM_BLOCKS)]
    return block_params, raw


# ---------------------------- deterministic init + host-side packing -------------------
def init_params(key):
    kit = iter(jax.random.split(key, 128))

    def linear(in_d, out_d):
        # matches nn.Linear default init: U(-1/sqrt(in), 1/sqrt(in)) for W and b
        lim = 1.0 / math.sqrt(in_d)
        w = jax.random.uniform(next(kit), (in_d, out_d), jnp.float32, -lim, lim)
        b = jax.random.uniform(next(kit), (1, out_d), jnp.float32, -lim, lim)
        return w, b

    Wsh, bsh = linear(Z_G_DIM, NUM_MAPS)                   # shared_layer

    W1_l, b1_l, W2_l, b2_l, W3_l, b3_l, reg_l, off_l = ([] for _ in range(8))
    for _blk in range(NUM_BLOCKS):
        # the same regularizer tensor is shared by the 4 parameter lists of a block
        block_reg = (0.001 * jax.random.normal(next(kit), (NUM_MAPS,))).astype(jnp.float32)
        for t in range(4):                                 # gamma1, beta1, gamma2, beta2
            w1, bb1 = linear(NUM_MAPS, NUM_MAPS)
            w2, bb2 = linear(NUM_MAPS, NUM_MAPS)
            w3, bb3 = linear(NUM_MAPS, NUM_MAPS)
            W1_l.append(w1); b1_l.append(bb1)
            W2_l.append(w2); b2_l.append(bb2)
            W3_l.append(w3); b3_l.append(bb3)
            reg_l.append(block_reg.reshape(1, NUM_MAPS))
            off_l.append(jnp.full((1, NUM_MAPS),
                                  1.0 if t in (0, 2) else 0.0, jnp.float32))

    # raw per-processor params (for the pure-JAX reference)
    raw = dict(
        Wsh=Wsh, bsh=bsh,
        W1=jnp.stack(W1_l), b1=jnp.stack(b1_l),
        W2=jnp.stack(W2_l), b2=jnp.stack(b2_l),
        W3=jnp.stack(W3_l), b3=jnp.stack(b3_l),
        reg=jnp.stack(reg_l), off=jnp.stack(off_l),
    )

    # ---- pack into kernel layout ONCE, host-side -------------------------------------
    W1cat = jnp.concatenate(W1_l, axis=1)                          # (64, 512)
    W2bd = jax.scipy.linalg.block_diag(*W2_l)                      # (512, 512), exact 0 off-diag
    W3bd = jax.scipy.linalg.block_diag(*W3_l)                      # (512, 512), exact 0 off-diag
    Wbig = jnp.concatenate([W1cat, W2bd, W3bd], axis=0)            # (1088, 512)

    rows = jnp.concatenate([
        jnp.concatenate(b1_l, axis=1),                             # b1cat  (1, 512)
        jnp.concatenate(b2_l, axis=1),                             # b2cat
        jnp.concatenate(b3_l, axis=1),                             # b3cat
        jnp.concatenate(reg_l, axis=1),                            # regcat
        jnp.concatenate(off_l, axis=1),                            # offcat
    ], axis=0)                                                     # (5, 512)

    Wsh_aug = jnp.concatenate([Wsh, bsh], axis=0)                  # (33, 64)

    packed = dict(Wsh_aug=Wsh_aug, Wbig=Wbig, rows=rows)
    return packed, raw


# ---------------------------- pure-JAX reference (original per-processor math) ---------
def reference_forward(raw, x):
    dot = partial(jnp.dot, precision=jax.lax.Precision.HIGHEST)
    h = jnp.maximum(dot(x, raw['Wsh']) + raw['bsh'], 0.0)
    outs = []
    for p in range(P):
        y1 = jnp.maximum(dot(h, raw['W1'][p]) + raw['b1'][p] + h, 0.0)
        y2 = jnp.maximum(dot(y1, raw['W2'][p]) + raw['b2'][p] + y1, 0.0)
        y3 = dot(y2, raw['W3'][p]) + raw['b3'][p] + y2
        outs.append((y3 * raw['reg'][p] + raw['off'][p]).reshape(-1))
    return jnp.stack(outs)                                         # (P, NUM_MAPS)


# ---------------------------- main ------------------------------------------------------
if __name__ == "__main__":
    key = jax.random.PRNGKey(0)
    k_par, k_x = jax.random.split(key)
    packed_params, raw_params = init_params(k_par)
    x = jax.random.normal(k_x, (1, Z_G_DIM), jnp.float32)          # task representation z

    block_params, out = film_layer_forward(packed_params, x)
    jax.block_until_ready(out)

    ref = reference_forward(raw_params, x)
    np.testing.assert_allclose(np.asarray(out), np.asarray(ref), rtol=2e-3, atol=2e-3)
    assert len(block_params) == NUM_BLOCKS
    assert block_params[0]['gamma1'].shape == (NUM_MAPS,)
    assert block_params[1]['beta2'].shape == (NUM_MAPS,)
    print("KERNEL_OK")
</pallas_src>

<mosaic_0001>
module attributes {stable_mosaic.version = 11 : i64} {
  func.func @film_kernel(%arg0: memref<1x32xf32, #tpu.memory_space<vmem>>, %arg1: memref<33x64xf32, #tpu.memory_space<vmem>>, %arg2: memref<1088x512xf32, #tpu.memory_space<vmem>>, %arg3: memref<5x512xf32, #tpu.memory_space<vmem>>, %arg4: memref<1x512xf32, #tpu.memory_space<vmem>>) attributes {dimension_semantics = [], scalar_prefetch = 0 : i64, scratch_operands = 0 : i64, tpu.core_type = #tpu.core_type<tc>} {
    %c0 = arith.constant 0 : index
    %c0_0 = arith.constant 0 : index
    %0 = vector.load %arg0[%c0, %c0_0] : memref<1x32xf32, #tpu.memory_space<vmem>>, vector<1x32xf32>
    %c0_1 = arith.constant 0 : index
    %c0_2 = arith.constant 0 : index
    %1 = vector.load %arg1[%c0_1, %c0_2] : memref<33x64xf32, #tpu.memory_space<vmem>>, vector<32x64xf32>
    %c32 = arith.constant 32 : index
    %c0_3 = arith.constant 0 : index
    %2 = vector.load %arg1[%c32, %c0_3] : memref<33x64xf32, #tpu.memory_space<vmem>>, vector<1x64xf32>
    %cst = arith.constant dense<0.000000e+00> : vector<1x64xf32>
    %3 = tpu.matmul %0, %1, %cst {dimension_numbers = #tpu.dot_dimension_numbers<[1], [0], [0], [1], [0, 0, 1, 1], [], []>} : vector<1x32xf32>, vector<32x64xf32>, vector<1x64xf32> -> vector<1x64xf32>
    %4 = arith.addf %3, %2 : vector<1x64xf32>
    %cst_4 = arith.constant 0.000000e+00 : f32
    %5 = vector.broadcast %cst_4 : f32 to vector<1x64xf32>
    %6 = arith.maximumf %4, %5 : vector<1x64xf32>
    %7 = tpu.concatenate %6, %6, %6, %6, %6, %6, %6, %6 in 1 : vector<1x64xf32>, vector<1x64xf32>, vector<1x64xf32>, vector<1x64xf32>, vector<1x64xf32>, vector<1x64xf32>, vector<1x64xf32>, vector<1x64xf32> -> vector<1x512xf32>
    %c0_5 = arith.constant 0 : index
    %c0_6 = arith.constant 0 : index
    %8 = vector.load %arg2[%c0_5, %c0_6] : memref<1088x512xf32, #tpu.memory_space<vmem>>, vector<64x512xf32>
    %c64 = arith.constant 64 : index
    %c0_7 = arith.constant 0 : index
    %9 = vector.load %arg2[%c64, %c0_7] : memref<1088x512xf32, #tpu.memory_space<vmem>>, vector<512x512xf32>
    %c576 = arith.constant 576 : index
    %c0_8 = arith.constant 0 : index
    %10 = vector.load %arg2[%c576, %c0_8] : memref<1088x512xf32, #tpu.memory_space<vmem>>, vector<512x512xf32>
    %c0_9 = arith.constant 0 : index
    %c0_10 = arith.constant 0 : index
    %11 = vector.load %arg3[%c0_9, %c0_10] : memref<5x512xf32, #tpu.memory_space<vmem>>, vector<1x512xf32>
    %c1 = arith.constant 1 : index
    %c0_11 = arith.constant 0 : index
    %12 = vector.load %arg3[%c1, %c0_11] : memref<5x512xf32, #tpu.memory_space<vmem>>, vector<1x512xf32>
    %c2 = arith.constant 2 : index
    %c0_12 = arith.constant 0 : index
    %13 = vector.load %arg3[%c2, %c0_12] : memref<5x512xf32, #tpu.memory_space<vmem>>, vector<1x512xf32>
    %c3 = arith.constant 3 : index
    %c0_13 = arith.constant 0 : index
    %14 = vector.load %arg3[%c3, %c0_13] : memref<5x512xf32, #tpu.memory_space<vmem>>, vector<1x512xf32>
    %c4 = arith.constant 4 : index
    %c0_14 = arith.constant 0 : index
    %15 = vector.load %arg3[%c4, %c0_14] : memref<5x512xf32, #tpu.memory_space<vmem>>, vector<1x512xf32>
    %cst_15 = arith.constant dense<0.000000e+00> : vector<1x512xf32>
    %16 = tpu.matmul %6, %8, %cst_15 {dimension_numbers = #tpu.dot_dimension_numbers<[1], [0], [0], [1], [0, 0, 1, 1], [], []>} : vector<1x64xf32>, vector<64x512xf32>, vector<1x512xf32> -> vector<1x512xf32>
    %17 = arith.addf %16, %11 : vector<1x512xf32>
    %18 = arith.addf %17, %7 : vector<1x512xf32>
    %cst_16 = arith.constant 0.000000e+00 : f32
    %19 = vector.broadcast %cst_16 : f32 to vector<1x512xf32>
    %20 = arith.maximumf %18, %19 : vector<1x512xf32>
    %cst_17 = arith.constant dense<0.000000e+00> : vector<1x512xf32>
    %21 = tpu.matmul %20, %9, %cst_17 {dimension_numbers = #tpu.dot_dimension_numbers<[1], [0], [0], [1], [0, 0, 1, 1], [], []>} : vector<1x512xf32>, vector<512x512xf32>, vector<1x512xf32> -> vector<1x512xf32>
    %22 = arith.addf %21, %12 : vector<1x512xf32>
    %23 = arith.addf %22, %20 : vector<1x512xf32>
    %cst_18 = arith.constant 0.000000e+00 : f32
    %24 = vector.broadcast %cst_18 : f32 to vector<1x512xf32>
    %25 = arith.maximumf %23, %24 : vector<1x512xf32>
    %cst_19 = arith.constant dense<0.000000e+00> : vector<1x512xf32>
    %26 = tpu.matmul %25, %10, %cst_19 {dimension_numbers = #tpu.dot_dimension_numbers<[1], [0], [0], [1], [0, 0, 1, 1], [], []>} : vector<1x512xf32>, vector<512x512xf32>, vector<1x512xf32> -> vector<1x512xf32>
    %27 = arith.addf %26, %13 : vector<1x512xf32>
    %28 = arith.addf %27, %25 : vector<1x512xf32>
    %29 = arith.mulf %28, %14 : vector<1x512xf32>
    %30 = arith.addf %29, %15 : vector<1x512xf32>
    %c0_20 = arith.constant 0 : index
    %c0_21 = arith.constant 0 : index
    %31 = vector.load %arg4[%c0_20, %c0_21] : memref<1x512xf32, #tpu.memory_space<vmem>>, vector<1x512xf32>
    tpu.vector_store %arg4[%c0_20, %c0_21], %30 {strides = array<i32>} : memref<1x512xf32, #tpu.memory_space<vmem>>, vector<1x512xf32>,
    return
  }
}

</mosaic_0001>

<llo_original>
// kernel: film_forward.1
$region0: #{film_forward.1}
  #allocation0 [shape = 'u32[]', space=smem, size = 0x4, offset = 0x4, fixed_abs, tag = 'smem constant byte address 0x4 - core index']
  #allocation1 [shape = 'u32[144,128]{1,0:T(1,128)}', space=vmem, size = 0x12000, scoped, tag = 'internal scratch']
  %s0 = inlined_call_operand.hbm [shape: f32[1,32], index: 0, kind: input, shape index: {}]
  %s1 = inlined_call_operand.hbm [shape: f32[33,64], index: 1, kind: input, shape index: {}]
  %s2 = inlined_call_operand.hbm [shape: f32[1088,512], index: 2, kind: input, shape index: {}]
  %s3 = inlined_call_operand.hbm [shape: f32[5,512], index: 3, kind: input, shape index: {}]
  %s4 = inlined_call_operand.hbm [shape: f32[1,512], index: 4, kind: output, shape index: {}]
  %s5 = sld [smem:[#allocation0]]
  $region42: #{film_forward.1} parent=0
    _
  %s7 = ssub.s32 1, %s5
  %s8 = scalar_select 0, %s7, %s5
  $region1: #{film_forward.1} parent=0
    #allocation2 [shape = 'u8[512]{0}', space=vmem, size = 0x400, scoped, tag = 'input window, operand 0, single buffered']
    #allocation3 [shape = 's32[1]{0}', space=sflag, size = 0x4, scoped, tag = 'scoped memory for film_forward.1']
    #allocation4 [shape = 's32[1]{0}', space=sflag, size = 0x4, scoped, tag = 'scoped memory for film_forward.1']
    #allocation5 [shape = 'u8[20480]{0}', space=vmem, size = 0x5000, scoped, tag = 'input window, operand 1, single buffered']
    #allocation6 [shape = 's32[1]{0}', space=sflag, size = 0x4, scoped, tag = 'scoped memory for film_forward.1']
    #allocation7 [shape = 'u8[2228224]{0}', space=vmem, size = 0x220000, scoped, tag = 'input window, operand 2, single buffered']
    #allocation8 [shape = 'u8[16384]{0}', space=vmem, size = 0x4000, scoped, tag = 'input window, operand 3, single buffered']
    #allocation9 [shape = 's32[1]{0}', space=sflag, size = 0x4, scoped, tag = 'scoped memory for film_forward.1']
    #allocation10 [shape = 'u8[2048]{0}', space=vmem, size = 0x800, scoped, tag = 'output window, operand 0, single buffered']
    %9 = vsyncpa [#allocation3], 0
    %10 = vsyncpa [#allocation6], 0
    %11 = vsyncpa [#allocation9], 0
    %12 = vsyncpa [#allocation4], 0
    // Predicated region
    $region2: #{film_forward.1} parent=1 // pred_check
      _
    $region3: #{film_forward.1} parent=1 // pred_check_branch
      %14 = sbr.rel (0) target = $region5
    $region4: #{film_forward.1} parent=1 // pred_region
      %s16 = ssub.s32 16, 16
      %17 = vsyncadd [#allocation3], %s16
      %s19 = sshll.u32 [#allocation2], 4
      %s20 = int_to_ptr.vmem [resolvable:$true] %s19
      %22 = dma.hbm_to_vmem [thread:$0]  %s0, 16, %s20, [#allocation3]
    $region5: #{film_forward.1} parent=1 // pred_fallthru
      _
    // Predicated region
    $region6: #{film_forward.1} parent=1 // pred_check
      _
    $region7: #{film_forward.1} parent=1 // pred_check_branch
      %24 = sbr.rel (0) target = $region9
    $region8: #{film_forward.1} parent=1 // pred_region
      %s26 = ssub.s32 640, 640
      %27 = vsyncadd [#allocation6], %s26
      %s28 = sshll.u32 [#allocation5], 4
      %s29 = int_to_ptr.vmem [resolvable:$true] %s28
      %34 = dma.hbm_to_vmem [thread:$0]  %s1, 640, %s29, [#allocation6], 128, 128, 8
    $region9: #{film_forward.1} parent=1 // pred_fallthru
      _
    // Predicated region
    $region10: #{film_forward.1} parent=1 // pred_check
      _
    $region11: #{film_forward.1} parent=1 // pred_check_branch
      %36 = sbr.rel (0) target = $region13
    $region12: #{film_forward.1} parent=1 // pred_region
      %s38 = ssub.s32 69632, 69632
      %39 = vsyncadd [#allocation6], %s38
      %s40 = sshll.u32 [#allocation7], 4
      %s41 = int_to_ptr.vmem [resolvable:$true] %s40
      %46 = dma.hbm_to_vmem [thread:$0]  %s2, 69632, %s41, [#allocation6], 512, 512, 32
    $region13: #{film_forward.1} parent=1 // pred_fallthru
      _
    // Predicated region
    $region14: #{film_forward.1} parent=1 // pred_check
      _
    $region15: #{film_forward.1} parent=1 // pred_check_branch
      %48 = sbr.rel (0) target = $region17
    $region16: #{film_forward.1} parent=1 // pred_region
      %s50 = ssub.s32 512, 512
      %51 = vsyncadd [#allocation9], %s50
      %s53 = sshll.u32 [#allocation8], 4
      %s54 = int_to_ptr.vmem [resolvable:$true] %s53
      %56 = dma.hbm_to_vmem [thread:$0]  %s3, 512, %s54, [#allocation9]
    $region17: #{film_forward.1} parent=1 // pred_fallthru
      _
    // Predicated region
    $region18: #{film_forward.1} parent=1 // pred_check
      _
    $region19: #{film_forward.1} parent=1 // pred_check_branch
      %58 = sbr.rel (0) target = $region21
    $region20: #{film_forward.1} parent=1 // pred_region
      %59 = dma.done [#allocation3], 16
    $region21: #{film_forward.1} parent=1 // pred_fallthru
      _
    // Predicated region
    $region22: #{film_forward.1} parent=1 // pred_check
      _
    $region23: #{film_forward.1} parent=1 // pred_check_branch
      %61 = sbr.rel (0) target = $region25
    $region24: #{film_forward.1} parent=1 // pred_region
      %62 = dma.done [#allocation6], 640
    $region25: #{film_forward.1} parent=1 // pred_fallthru
      _
    // Predicated region
    $region26: #{film_forward.1} parent=1 // pred_check
      _
    $region27: #{film_forward.1} parent=1 // pred_check_branch
      %64 = sbr.rel (0) target = $region29
    $region28: #{film_forward.1} parent=1 // pred_region
      %65 = dma.done [#allocation6], 69632
    $region29: #{film_forward.1} parent=1 // pred_fallthru
      _
    // Predicated region
    $region30: #{film_forward.1} parent=1 // pred_check
      _
    $region31: #{film_forward.1} parent=1 // pred_check_branch
      %67 = sbr.rel (0) target = $region33
    $region32: #{film_forward.1} parent=1 // pred_region
      %68 = dma.done [#allocation9], 512
    $region33: #{film_forward.1} parent=1 // pred_fallthru
      _
    %v69 = vld [vmem:[#allocation2] sm:$0x1]
    %v70 = vld [vmem:[#allocation5] sm:$0xff]
    %v71 = vld [vmem:[#allocation5 + $0x8] sm:$0xff]
    %v72 = vld [vmem:[#allocation5 + $0x10] sm:$0xff]
    %v73 = vld [vmem:[#allocation5 + $0x18] sm:$0xff]
    %v74 = vld [vmem:[#allocation5 + $0x20] sm:$0x1]
    %vm75 = vcmask 261120
    %v77 = vsel %vm75, %v69, 0
    %79 = vmatprep.subr.mxu0 0.0
    %80 = vmatpush1.msra.mxu0 %v70
    %81 = vmatprep.subr.mxu0 0.0
    %82 = vmatpush1.msra.mxu0 %v71
    %83 = vmatprep.subr.mxu0 0.0
    %84 = vmatpush1.msra.mxu0 %v72
    %85 = vmatprep.subr.mxu0 0.0
    %86 = vmatpush1.msra.mxu0 %v73
    %87 = vmatprep.subr.mxu0 0.0
    %88 = vmatpush1.msra.mxu0 0.0
    %89 = vmatprep.subr.mxu0 0.0
    %90 = vmatpush1.msra.mxu0 0.0
    %91 = vmatprep.subr.mxu0 0.0
    %92 = vmatpush1.msra.mxu0 0.0
    %93 = vmatprep.subr.mxu0 0.0
    %94 = vmatpush1.msra.mxu0 0.0
    %95 = vmatprep.subr.mxu0 0.0
    %96 = vmatpush1.msra.mxu0 0.0
    %97 = vmatprep.subr.mxu0 0.0
    %98 = vmatpush1.msra.mxu0 0.0
    %99 = vmatprep.subr.mxu0 0.0
    %100 = vmatpush1.msra.mxu0 0.0
    %101 = vmatprep.subr.mxu0 0.0
    %102 = vmatpush1.msra.mxu0 0.0
    %103 = vmatprep.subr.mxu0 0.0
    %104 = vmatpush1.msra.mxu0 0.0
    %105 = vmatprep.subr.mxu0 0.0
    %106 = vmatpush1.msra.mxu0 0.0
    %107 = vmatprep.subr.mxu0 0.0
    %108 = vmatpush1.msra.mxu0 0.0
    %109 = vmatprep.subr.mxu0 0.0
    %110 = vmatpush1.msra.mxu0 0.0
    %111 = vmatprep.subr.mxu0 0.0
    %112 = vmatpush1.msra.mxu0 0.0
    %113 = vmatprep.subr.mxu0 0.0
    %114 = vmatpush1.msra.mxu0 0.0
    %115 = vmatprep.subr.mxu0 0.0
    %116 = vmatpush1.msra.mxu0 0.0
    %117 = vmatprep.subr.mxu0 0.0
    %118 = vmatpush1.msra.mxu0 0.0
    %119 = vmatprep.subr.mxu0 0.0
    %120 = vmatpush1.msra.mxu0 0.0
    %121 = vmatprep.subr.mxu0 0.0
    %122 = vmatpush1.msra.mxu0 0.0
    %123 = vmatprep.subr.mxu0 0.0
    %124 = vmatpush1.msra.mxu0 0.0
    %125 = vmatprep.subr.mxu0 0.0
    %126 = vmatpush1.msra.mxu0 0.0
    %127 = vmatprep.subr.mxu0 0.0
    %128 = vmatpush1.msra.mxu0 0.0
    %129 = vmatprep.subr.mxu0 0.0
    %130 = vmatpush1.msra.mxu0 0.0
    %131 = vmatprep.subr.mxu0 0.0
    %132 = vmatpush1.msra.mxu0 0.0
    %133 = vmatprep.subr.mxu0 0.0
    %134 = vmatpush1.msra.mxu0 0.0
    %135 = vmatprep.subr.mxu0 0.0
    %136 = vmatpush1.msra.mxu0 0.0
    %137 = vmatprep.subr.mxu0 0.0
    %138 = vmatpush1.msra.mxu0 0.0
    %139 = vmatprep.subr.mxu0 0.0
    %140 = vmatpush1.msra.mxu0 0.0
    %141 = vmatprep.subr.mxu0 0.0
    %142 = vmatpush1.msra.mxu0 0.0
    %143 = vmatprep.mubr.f32.mxu0 0.0
    %144 = vmatmul.mubr.f32.gmra.mrb[0].mxu0 %v77
    %v145 = vpop.f32.mrb[0].mxu0
    %v146 = vadd.f32 %v74, %v145
    %v147 = vpop.f32.mrb[0].mxu0
    %148 = vdwg.mxu0
    %v149 = vmax.f32 %v146, 0.0
    %151 = vrot.lane.b32.xlu0 %v149, 64
    %v152 = vpop.permute.xlu0 %151
    %vm154 = vcmask 523264
    %v155 = vsel %vm154, %v149, %v152
    %v156 = vld [vmem:[#allocation7] sm:$0xff]
    %v157 = vld [vmem:[#allocation7 + $0x8] sm:$0xff]
    %v158 = vld [vmem:[#allocation7 + $0x10] sm:$0xff]
    %v159 = vld [vmem:[#allocation7 + $0x18] sm:$0xff]
    %v160 = vld [vmem:[#allocation7 + $0x20] sm:$0xff]
    %v161 = vld [vmem:[#allocation7 + $0x28] sm:$0xff]
    %v162 = vld [vmem:[#allocation7 + $0x30] sm:$0xff]
    %v163 = vld [vmem:[#allocation7 + $0x38] sm:$0xff]
    %v164 = vld [vmem:[#allocation7 + $0x40] sm:$0xff]
    %v165 = vld [vmem:[#allocation7 + $0x48] sm:$0xff]
    %v166 = vld [vmem:[#allocation7 + $0x50] sm:$0xff]
    %v167 = vld [vmem:[#allocation7 + $0x58] sm:$0xff]
    %v168 = vld [vmem:[#allocation7 + $0x60] sm:$0xff]
    %v169 = vld [vmem:[#allocation7 + $0x68] sm:$0xff]
    %v170 = vld [vmem:[#allocation7 + $0x70] sm:$0xff]
    %v171 = vld [vmem:[#allocation7 + $0x78] sm:$0xff]
    %v172 = vld [vmem:[#allocation7 + $0x80] sm:$0xff]
    %v173 = vld [vmem:[#allocation7 + $0x88] sm:$0xff]
    %v174 = vld [vmem:[#allocation7 + $0x90] sm:$0xff]
    %v175 = vld [vmem:[#allocation7 + $0x98] sm:$0xff]
    %v176 = vld [vmem:[#allocation7 + $0xa0] sm:$0xff]
    %v177 = vld [vmem:[#allocation7 + $0xa8] sm:$0xff]
    %v178 = vld [vmem:[#allocation7 + $0xb0] sm:$0xff]
    %v179 = vld [vmem:[#allocation7 + $0xb8] sm:$0xff]
    %v180 = vld [vmem:[#allocation7 + $0xc0] sm:$0xff]
    %v181 = vld [vmem:[#allocation7 + $0xc8] sm:$0xff]
    %v182 = vld [vmem:[#allocation7 + $0xd0] sm:$0xff]
    %v183 = vld [vmem:[#allocation7 + $0xd8] sm:$0xff]
    %v184 = vld [vmem:[#allocation7 + $0xe0] sm:$0xff]
    %v185 = vld [vmem:[#allocation7 + $0xe8] sm:$0xff]
    %v186 = vld [vmem:[#allocation7 + $0xf0] sm:$0xff]
    %v187 = vld [vmem:[#allocation7 + $0xf8] sm:$0xff]
    %v188 = vld [vmem:[#allocation7 + $0x100] sm:$0xff]
    %v189 = vld [vmem:[#allocation7 + $0x108] sm:$0xff]
    %v190 = vld [vmem:[#allocation7 + $0x110] sm:$0xff]
    %v191 = vld [vmem:[#allocation7 + $0x118] sm:$0xff]
    %v192 = vld [vmem:[#allocation7 + $0x120] sm:$0xff]
    %v193 = vld [vmem:[#allocation7 + $0x128] sm:$0xff]
    %v194 = vld [vmem:[#allocation7 + $0x130] sm:$0xff]
    %v195 = vld [vmem:[#allocation7 + $0x138] sm:$0xff]
    %v196 = vld [vmem:[#allocation7 + $0x140] sm:$0xff]
    %v197 = vld [vmem:[#allocation7 + $0x148] sm:$0xff]
    %v198 = vld [vmem:[#allocation7 + $0x150] sm:$0xff]
    %v199 = vld [vmem:[#allocation7 + $0x158] sm:$0xff]
    %v200 = vld [vmem:[#allocation7 + $0x160] sm:$0xff]
    %v201 = vld [vmem:[#allocation7 + $0x168] sm:$0xff]
    %v202 = vld [vmem:[#allocation7 + $0x170] sm:$0xff]
    %v203 = vld [vmem:[#allocation7 + $0x178] sm:$0xff]
    %v204 = vld [vmem:[#allocation7 + $0x180] sm:$0xff]
    %v205 = vld [vmem:[#allocation7 + $0x188] sm:$0xff]
    %v206 = vld [vmem:[#allocation7 + $0x190] sm:$0xff]
    %v207 = vld [vmem:[#allocation7 + $0x198] sm:$0xff]
    %v208 = vld [vmem:[#allocation7 + $0x1a0] sm:$0xff]
    %v209 = vld [vmem:[#allocation7 + $0x1a8] sm:$0xff]
    %v210 = vld [vmem:[#allocation7 + $0x1b0] sm:$0xff]
    %v211 = vld [vmem:[#allocation7 + $0x1b8] sm:$0xff]
    %v212 = vld [vmem:[#allocation7 + $0x1c0] sm:$0xff]
    %v213 = vld [vmem:[#allocation7 + $0x1c8] sm:$0xff]
    %v214 = vld [vmem:[#allocation7 + $0x1d0] sm:$0xff]
    %v215 = vld [vmem:[#allocation7 + $0x1d8] sm:$0xff]
    %v216 = vld [vmem:[#allocation7 + $0x1e0] sm:$0xff]
    %v217 = vld [vmem:[#allocation7 + $0x1e8] sm:$0xff]
    %v218 = vld [vmem:[#allocation7 + $0x1f0] sm:$0xff]
    %v219 = vld [vmem:[#allocation7 + $0x1f8] sm:$0xff]
    %v220 = vld [vmem:[#allocation7 + $0x200] sm:$0xff]
    %v221 = vld [vmem:[#allocation7 + $0x208] sm:$0xff]
    %v222 = vld [vmem:[#allocation7 + $0x210] sm:$0xff]
    %v223 = vld [vmem:[#allocation7 + $0x218] sm:$0xff]
    %v224 = vld [vmem:[#allocation7 + $0x220] sm:$0xff]
    %v225 = vld [vmem:[#allocation7 + $0x228] sm:$0xff]
    %v226 = vld [vmem:[#allocation7 + $0x230] sm:$0xff]
    %v227 = vld [vmem:[#allocation7 + $0x238] sm:$0xff]
    %v228 = vld [vmem:[#allocation7 + $0x240] sm:$0xff]
    %v229 = vld [vmem:[#allocation7 + $0x248] sm:$0xff]
    %v230 = vld [vmem:[#allocation7 + $0x250] sm:$0xff]
    %v231 = vld [vmem:[#allocation7 + $0x258] sm:$0xff]
    %v232 = vld [vmem:[#allocation7 + $0x260] sm:$0xff]
    %v233 = vld [vmem:[#allocation7 + $0x268] sm:$0xff]
    %v234 = vld [vmem:[#allocation7 + $0x270] sm:$0xff]
    %v235 = vld [vmem:[#allocation7 + $0x278] sm:$0xff]
    %v236 = vld [vmem:[#allocation7 + $0x280] sm:$0xff]
    %v237 = vld [vmem:[#allocation7 + $0x288] sm:$0xff]
    %v238 = vld [vmem:[#allocation7 + $0x290] sm:$0xff]
    %v239 = vld [vmem:[#allocation7 + $0x298] sm:$0xff]
    %v240 = vld [vmem:[#allocation7 + $0x2a0] sm:$0xff]
    %v241 = vld [vmem:[#allocation7 + $0x2a8] sm:$0xff]
    %v242 = vld [vmem:[#allocation7 + $0x2b0] sm:$0xff]
    %v243 = vld [vmem:[#allocation7 + $0x2b8] sm:$0xff]
    %v244 = vld [vmem:[#allocation7 + $0x2c0] sm:$0xff]
    %v245 = vld [vmem:[#allocation7 + $0x2c8] sm:$0xff]
    %v246 = vld [vmem:[#allocation7 + $0x2d0] sm:$0xff]
    %v247 = vld [vmem:[#allocation7 + $0x2d8] sm:$0xff]
    %v248 = vld [vmem:[#allocation7 + $0x2e0] sm:$0xff]
    %v249 = vld [vmem:[#allocation7 + $0x2e8] sm:$0xff]
    %v250 = vld [vmem:[#allocation7 + $0x2f0] sm:$0xff]
    %v251 = vld [vmem:[#allocation7 + $0x2f8] sm:$0xff]
    %v252 = vld [vmem:[#allocation7 + $0x300] sm:$0xff]
    %v253 = vld [vmem:[#allocation7 + $0x308] sm:$0xff]
    %v254 = vld [vmem:[#allocation7 + $0x310] sm:$0xff]
    %v255 = vld [vmem:[#allocation7 + $0x318] sm:$0xff]
    %v256 = vld [vmem:[#allocation7 + $0x320] sm:$0xff]
    %v257 = vld [vmem:[#allocation7 + $0x328] sm:$0xff]
    %v258 = vld [vmem:[#allocation7 + $0x330] sm:$0xff]
    %v259 = vld [vmem:[#allocation7 + $0x338] sm:$0xff]
    %v260 = vld [vmem:[#allocation7 + $0x340] sm:$0xff]
    %v261 = vld [vmem:[#allocation7 + $0x348] sm:$0xff]
    %v262 = vld [vmem:[#allocation7 + $0x350] sm:$0xff]
    %v263 = vld [vmem:[#allocation7 + $0x358] sm:$0xff]
    %v264 = vld [vmem:[#allocation7 + $0x360] sm:$0xff]
    %v265 = vld [vmem:[#allocation7 + $0x368] sm:$0xff]
    %v266 = vld [vmem:[#allocation7 + $0x370] sm:$0xff]
    %v267 = vld [vmem:[#allocation7 + $0x378] sm:$0xff]
    %v268 = vld [vmem:[#allocation7 + $0x380] sm:$0xff]
    %v269 = vld [vmem:[#allocation7 + $0x388] sm:$0xff]
    %v270 = vld [vmem:[#allocation7 + $0x390] sm:$0xff]
    %v271 = vld [vmem:[#allocation7 + $0x398] sm:$0xff]
    %v272 = vld [vmem:[#allocation7 + $0x3a0] sm:$0xff]
    %v273 = vld [vmem:[#allocation7 + $0x3a8] sm:$0xff]
    %v274 = vld [vmem:[#allocation7 + $0x3b0] sm:$0xff]
    %v275 = vld [vmem:[#allocation7 + $0x3b8] sm:$0xff]
    %v276 = vld [vmem:[#allocation7 + $0x3c0] sm:$0xff]
    %v277 = vld [vmem:[#allocation7 + $0x3c8] sm:$0xff]
    %v278 = vld [vmem:[#allocation7 + $0x3d0] sm:$0xff]
    %v279 = vld [vmem:[#allocation7 + $0x3d8] sm:$0xff]
    %v280 = vld [vmem:[#allocation7 + $0x3e0] sm:$0xff]
    %v281 = vld [vmem:[#allocation7 + $0x3e8] sm:$0xff]
    %v282 = vld [vmem:[#allocation7 + $0x3f0] sm:$0xff]
    %v283 = vld [vmem:[#allocation7 + $0x3f8] sm:$0xff]
    %v284 = vld [vmem:[#allocation7 + $0x400] sm:$0xff]
    %v285 = vld [vmem:[#allocation7 + $0x408] sm:$0xff]
    %v286 = vld [vmem:[#allocation7 + $0x410] sm:$0xff]
    %v287 = vld [vmem:[#allocation7 + $0x418] sm:$0xff]
    %v288 = vld [vmem:[#allocation7 + $0x420] sm:$0xff]
    %v289 = vld [vmem:[#allocation7 + $0x428] sm:$0xff]
    %v290 = vld [vmem:[#allocation7 + $0x430] sm:$0xff]
    %v291 = vld [vmem:[#allocation7 + $0x438] sm:$0xff]
    %v292 = vld [vmem:[#allocation7 + $0x440] sm:$0xff]
    %v293 = vld [vmem:[#allocation7 + $0x448] sm:$0xff]
    %v294 = vld [vmem:[#allocation7 + $0x450] sm:$0xff]
    %v295 = vld [vmem:[#allocation7 + $0x458] sm:$0xff]
    %v296 = vld [vmem:[#allocation7 + $0x460] sm:$0xff]
    %v297 = vld [vmem:[#allocation7 + $0x468] sm:$0xff]
    %v298 = vld [vmem:[#allocation7 + $0x470] sm:$0xff]
    %v299 = vld [vmem:[#allocation7 + $0x478] sm:$0xff]
    %v300 = vld [vmem:[#allocation7 + $0x480] sm:$0xff]
    %v301 = vld [vmem:[#allocation7 + $0x488] sm:$0xff]
    %v302 = vld [vmem:[#allocation7 + $0x490] sm:$0xff]
    %v303 = vld [vmem:[#allocation7 + $0x498] sm:$0xff]
    %v304 = vld [vmem:[#allocation7 + $0x4a0] sm:$0xff]
    %v305 = vld [vmem:[#allocation7 + $0x4a8] sm:$0xff]
    %v306 = vld [vmem:[#allocation7 + $0x4b0] sm:$0xff]
    %v307 = vld [vmem:[#allocation7 + $0x4b8] sm:$0xff]
    %v308 = vld [vmem:[#allocation7 + $0x4c0] sm:$0xff]
    %v309 = vld [vmem:[#allocation7 + $0x4c8] sm:$0xff]
    %v310 = vld [vmem:[#allocation7 + $0x4d0] sm:$0xff]
    %v311 = vld [vmem:[#allocation7 + $0x4d8] sm:$0xff]
    %v312 = vld [vmem:[#allocation7 + $0x4e0] sm:$0xff]
    %v313 = vld [vmem:[#allocation7 + $0x4e8] sm:$0xff]
    %v314 = vld [vmem:[#allocation7 + $0x4f0] sm:$0xff]
    %v315 = vld [vmem:[#allocation7 + $0x4f8] sm:$0xff]
    %v316 = vld [vmem:[#allocation7 + $0x500] sm:$0xff]
    %v317 = vld [vmem:[#allocation7 + $0x508] sm:$0xff]
    %v318 = vld [vmem:[#allocation7 + $0x510] sm:$0xff]
    %v319 = vld [vmem:[#allocation7 + $0x518] sm:$0xff]
    %v320 = vld [vmem:[#allocation7 + $0x520] sm:$0xff]
    %v321 = vld [vmem:[#allocation7 + $0x528] sm:$0xff]
    %v322 = vld [vmem:[#allocation7 + $0x530] sm:$0xff]
    %v323 = vld [vmem:[#allocation7 + $0x538] sm:$0xff]
    %v324 = vld [vmem:[#allocation7 + $0x540] sm:$0xff]
    %v325 = vld [vmem:[#allocation7 + $0x548] sm:$0xff]
    %v326 = vld [vmem:[#allocation7 + $0x550] sm:$0xff]
    %v327 = vld [vmem:[#allocation7 + $0x558] sm:$0xff]
    %v328 = vld [vmem:[#allocation7 + $0x560] sm:$0xff]
    %v329 = vld [vmem:[#allocation7 + $0x568] sm:$0xff]
    %v330 = vld [vmem:[#allocation7 + $0x570] sm:$0xff]
    %v331 = vld [vmem:[#allocation7 + $0x578] sm:$0xff]
    %v332 = vld [vmem:[#allocation7 + $0x580] sm:$0xff]
    %v333 = vld [vmem:[#allocation7 + $0x588] sm:$0xff]
    %v334 = vld [vmem:[#allocation7 + $0x590] sm:$0xff]
    %v335 = vld [vmem:[#allocation7 + $0x598] sm:$0xff]
    %v336 = vld [vmem:[#allocation7 + $0x5a0] sm:$0xff]
    %v337 = vld [vmem:[#allocation7 + $0x5a8] sm:$0xff]
    %v338 = vld [vmem:[#allocation7 + $0x5b0] sm:$0xff]
    %v339 = vld [vmem:[#allocation7 + $0x5b8] sm:$0xff]
    %v340 = vld [vmem:[#allocation7 + $0x5c0] sm:$0xff]
    %v341 = vld [vmem:[#allocation7 + $0x5c8] sm:$0xff]
    %v342 = vld [vmem:[#allocation7 + $0x5d0] sm:$0xff]
    %v343 = vld [vmem:[#allocation7 + $0x5d8] sm:$0xff]
    %v344 = vld [vmem:[#allocation7 + $0x5e0] sm:$0xff]
    %v345 = vld [vmem:[#allocation7 + $0x5e8] sm:$0xff]
    %v346 = vld [vmem:[#allocation7 + $0x5f0] sm:$0xff]
    %v347 = vld [vmem:[#allocation7 + $0x5f8] sm:$0xff]
    %v348 = vld [vmem:[#allocation7 + $0x600] sm:$0xff]
    %v349 = vld [vmem:[#allocation7 + $0x608] sm:$0xff]
    %v350 = vld [vmem:[#allocation7 + $0x610] sm:$0xff]
    %v351 = vld [vmem:[#allocation7 + $0x618] sm:$0xff]
    %v352 = vld [vmem:[#allocation7 + $0x620] sm:$0xff]
    %v353 = vld [vmem:[#allocation7 + $0x628] sm:$0xff]
    %v354 = vld [vmem:[#allocation7 + $0x630] sm:$0xff]
    %v355 = vld [vmem:[#allocation7 + $0x638] sm:$0xff]
    %v356 = vld [vmem:[#allocation7 + $0x640] sm:$0xff]
    %v357 = vld [vmem:[#allocation7 + $0x648] sm:$0xff]
    %v358 = vld [vmem:[#allocation7 + $0x650] sm:$0xff]
    %v359 = vld [vmem:[#allocation7 + $0x658] sm:$0xff]
    %v360 = vld [vmem:[#allocation7 + $0x660] sm:$0xff]
    %v361 = vld [vmem:[#allocation7 + $0x668] sm:$0xff]
    %v362 = vld [vmem:[#allocation7 + $0x670] sm:$0xff]
    %v363 = vld [vmem:[#allocation7 + $0x678] sm:$0xff]
    %v364 = vld [vmem:[#allocation7 + $0x680] sm:$0xff]
    %v365 = vld [vmem:[#allocation7 + $0x688] sm:$0xff]
    %v366 = vld [vmem:[#allocation7 + $0x690] sm:$0xff]
    %v367 = vld [vmem:[#allocation7 + $0x698] sm:$0xff]
    %v368 = vld [vmem:[#allocation7 + $0x6a0] sm:$0xff]
    %v369 = vld [vmem:[#allocation7 + $0x6a8] sm:$0xff]
    %v370 = vld [vmem:[#allocation7 + $0x6b0] sm:$0xff]
    %v371 = vld [vmem:[#allocation7 + $0x6b8] sm:$0xff]
    %v372 = vld [vmem:[#allocation7 + $0x6c0] sm:$0xff]
    %v373 = vld [vmem:[#allocation7 + $0x6c8] sm:$0xff]
    %v374 = vld [vmem:[#allocation7 + $0x6d0] sm:$0xff]
    %v375 = vld [vmem:[#allocation7 + $0x6d8] sm:$0xff]
    %v376 = vld [vmem:[#allocation7 + $0x6e0] sm:$0xff]
    %v377 = vld [vmem:[#allocation7 + $0x6e8] sm:$0xff]
    %v378 = vld [vmem:[#allocation7 + $0x6f0] sm:$0xff]
    %v379 = vld [vmem:[#allocation7 + $0x6f8] sm:$0xff]
    %v380 = vld [vmem:[#allocation7 + $0x700] sm:$0xff]
    %v381 = vld [vmem:[#allocation7 + $0x708] sm:$0xff]
    %v382 = vld [vmem:[#allocation7 + $0x710] sm:$0xff]
    %v383 = vld [vmem:[#allocation7 + $0x718] sm:$0xff]
    %v384 = vld [vmem:[#allocation7 + $0x720] sm:$0xff]
    %v385 = vld [vmem:[#allocation7 + $0x728] sm:$0xff]
    %v386 = vld [vmem:[#allocation7 + $0x730] sm:$0xff]
    %v387 = vld [vmem:[#allocation7 + $0x738] sm:$0xff]
    %v388 = vld [vmem:[#allocation7 + $0x740] sm:$0xff]
    %v389 = vld [vmem:[#allocation7 + $0x748] sm:$0xff]
    %v390 = vld [vmem:[#allocation7 + $0x750] sm:$0xff]
    %v391 = vld [vmem:[#allocation7 + $0x758] sm:$0xff]
    %v392 = vld [vmem:[#allocation7 + $0x760] sm:$0xff]
    %v393 = vld [vmem:[#allocation7 + $0x768] sm:$0xff]
    %v394 = vld [vmem:[#allocation7 + $0x770] sm:$0xff]
    %v395 = vld [vmem:[#allocation7 + $0x778] sm:$0xff]
    %v396 = vld [vmem:[#allocation7 + $0x780] sm:$0xff]
    %v397 = vld [vmem:[#allocation7 + $0x788] sm:$0xff]
    %v398 = vld [vmem:[#allocation7 + $0x790] sm:$0xff]
    %v399 = vld [vmem:[#allocation7 + $0x798] sm:$0xff]
    %v400 = vld [vmem:[#allocation7 + $0x7a0] sm:$0xff]
    %v401 = vld [vmem:[#allocation7 + $0x7a8] sm:$0xff]
    %v402 = vld [vmem:[#allocation7 + $0x7b0] sm:$0xff]
    %v403 = vld [vmem:[#allocation7 + $0x7b8] sm:$0xff]
    %v404 = vld [vmem:[#allocation7 + $0x7c0] sm:$0xff]
    %v405 = vld [vmem:[#allocation7 + $0x7c8] sm:$0xff]
    %v406 = vld [vmem:[#allocation7 + $0x7d0] sm:$0xff]
    %v407 = vld [vmem:[#allocation7 + $0x7d8] sm:$0xff]
    %v408 = vld [vmem:[#allocation7 + $0x7e0] sm:$0xff]
    %v409 = vld [vmem:[#allocation7 + $0x7e8] sm:$0xff]
    %v410 = vld [vmem:[#allocation7 + $0x7f0] sm:$0xff]
    %v411 = vld [vmem:[#allocation7 + $0x7f8] sm:$0xff]
    %v412 = vld [vmem:[#allocation7 + $0x800] sm:$0xff]
    %v413 = vld [vmem:[#allocation7 + $0x808] sm:$0xff]
    %v414 = vld [vmem:[#allocation7 + $0x810] sm:$0xff]
    %v415 = vld [vmem:[#allocation7 + $0x818] sm:$0xff]
    %v416 = vld [vmem:[#allocation7 + $0x820] sm:$0xff]
    %v417 = vld [vmem:[#allocation7 + $0x828] sm:$0xff]
    %v418 = vld [vmem:[#allocation7 + $0x830] sm:$0xff]
    %v419 = vld [vmem:[#allocation7 + $0x838] sm:$0xff]
    %v420 = vld [vmem:[#allocation7 + $0x840] sm:$0xff]
    %v421 = vld [vmem:[#allocation7 + $0x848] sm:$0xff]
    %v422 = vld [vmem:[#allocation7 + $0x850] sm:$0xff]
    %v423 = vld [vmem:[#allocation7 + $0x858] sm:$0xff]
    %v424 = vld [vmem:[#allocation7 + $0x860] sm:$0xff]
    %v425 = vld [vmem:[#allocation7 + $0x868] sm:$0xff]
    %v426 = vld [vmem:[#allocation7 + $0x870] sm:$0xff]
    %v427 = vld [vmem:[#allocation7 + $0x878] sm:$0xff]
    %v428 = vld [vmem:[#allocation7 + $0x880] sm:$0xff]
    %v429 = vld [vmem:[#allocation7 + $0x888] sm:$0xff]
    %v430 = vld [vmem:[#allocation7 + $0x890] sm:$0xff]
    %v431 = vld [vmem:[#allocation7 + $0x898] sm:$0xff]
    %v432 = vld [vmem:[#allocation7 + $0x8a0] sm:$0xff]
    %v433 = vld [vmem:[#allocation7 + $0x8a8] sm:$0xff]
    %v434 = vld [vmem:[#allocation7 + $0x8b0] sm:$0xff]
    %v435 = vld [vmem:[#allocation7 + $0x8b8] sm:$0xff]
    %v436 = vld [vmem:[#allocation7 + $0x8c0] sm:$0xff]
    %v437 = vld [vmem:[#allocation7 + $0x8c8] sm:$0xff]
    %v438 = vld [vmem:[#allocation7 + $0x8d0] sm:$0xff]
    %v439 = vld [vmem:[#allocation7 + $0x8d8] sm:$0xff]
    %v440 = vld [vmem:[#allocation7 + $0x8e0] sm:$0xff]
    %v441 = vld [vmem:[#allocation7 + $0x8e8] sm:$0xff]
    %v442 = vld [vmem:[#allocation7 + $0x8f0] sm:$0xff]
    %v443 = vld [vmem:[#allocation7 + $0x8f8] sm:$0xff]
    %v444 = vld [vmem:[#allocation7 + $0x900] sm:$0xff]
    %v445 = vld [vmem:[#allocation7 + $0x908] sm:$0xff]
    %v446 = vld [vmem:[#allocation7 + $0x910] sm:$0xff]
    %v447 = vld [vmem:[#allocation7 + $0x918] sm:$0xff]
    %v448 = vld [vmem:[#allocation7 + $0x920] sm:$0xff]
    %v449 = vld [vmem:[#allocation7 + $0x928] sm:$0xff]
    %v450 = vld [vmem:[#allocation7 + $0x930] sm:$0xff]
    %v451 = vld [vmem:[#allocation7 + $0x938] sm:$0xff]
    %v452 = vld [vmem:[#allocation7 + $0x940] sm:$0xff]
    %v453 = vld [vmem:[#allocation7 + $0x948] sm:$0xff]
    %v454 = vld [vmem:[#allocation7 + $0x950] sm:$0xff]
    %v455 = vld [vmem:[#allocation7 + $0x958] sm:$0xff]
    %v456 = vld [vmem:[#allocation7 + $0x960] sm:$0xff]
    %v457 = vld [vmem:[#allocation7 + $0x968] sm:$0xff]
    %v458 = vld [vmem:[#allocation7 + $0x970] sm:$0xff]
    %v459 = vld [vmem:[#allocation7 + $0x978] sm:$0xff]
    %v460 = vld [vmem:[#allocation7 + $0x980] sm:$0xff]
    %v461 = vld [vmem:[#allocation7 + $0x988] sm:$0xff]
    %v462 = vld [vmem:[#allocation7 + $0x990] sm:$0xff]
    %v463 = vld [vmem:[#allocation7 + $0x998] sm:$0xff]
    %v464 = vld [vmem:[#allocation7 + $0x9a0] sm:$0xff]
    %v465 = vld [vmem:[#allocation7 + $0x9a8] sm:$0xff]
    %v466 = vld [vmem:[#allocation7 + $0x9b0] sm:$0xff]
    %v467 = vld [vmem:[#allocation7 + $0x9b8] sm:$0xff]
    %v468 = vld [vmem:[#allocation7 + $0x9c0] sm:$0xff]
    %v469 = vld [vmem:[#allocation7 + $0x9c8] sm:$0xff]
    %v470 = vld [vmem:[#allocation7 + $0x9d0] sm:$0xff]
    %v471 = vld [vmem:[#allocation7 + $0x9d8] sm:$0xff]
    %v472 = vld [vmem:[#allocation7 + $0x9e0] sm:$0xff]
    %v473 = vld [vmem:[#allocation7 + $0x9e8] sm:$0xff]
    %v474 = vld [vmem:[#allocation7 + $0x9f0] sm:$0xff]
    %v475 = vld [vmem:[#allocation7 + $0x9f8] sm:$0xff]
    %v476 = vld [vmem:[#allocation7 + $0xa00] sm:$0xff]
    %v477 = vld [vmem:[#allocation7 + $0xa08] sm:$0xff]
    %v478 = vld [vmem:[#allocation7 + $0xa10] sm:$0xff]
    %v479 = vld [vmem:[#allocation7 + $0xa18] sm:$0xff]
    %v480 = vld [vmem:[#allocation7 + $0xa20] sm:$0xff]
    %v481 = vld [vmem:[#allocation7 + $0xa28] sm:$0xff]
    %v482 = vld [vmem:[#allocation7 + $0xa30] sm:$0xff]
    %v483 = vld [vmem:[#allocation7 + $0xa38] sm:$0xff]
    %v484 = vld [vmem:[#allocation7 + $0xa40] sm:$0xff]
    %v485 = vld [vmem:[#allocation7 + $0xa48] sm:$0xff]
    %v486 = vld [vmem:[#allocation7 + $0xa50] sm:$0xff]
    %v487 = vld [vmem:[#allocation7 + $0xa58] sm:$0xff]
    %v488 = vld [vmem:[#allocation7 + $0xa60] sm:$0xff]
    %v489 = vld [vmem:[#allocation7 + $0xa68] sm:$0xff]
    %v490 = vld [vmem:[#allocation7 + $0xa70] sm:$0xff]
    %v491 = vld [vmem:[#allocation7 + $0xa78] sm:$0xff]
    %v492 = vld [vmem:[#allocation7 + $0xa80] sm:$0xff]
    %v493 = vld [vmem:[#allocation7 + $0xa88] sm:$0xff]
    %v494 = vld [vmem:[#allocation7 + $0xa90] sm:$0xff]
    %v495 = vld [vmem:[#allocation7 + $0xa98] sm:$0xff]
    %v496 = vld [vmem:[#allocation7 + $0xaa0] sm:$0xff]
    %v497 = vld [vmem:[#allocation7 + $0xaa8] sm:$0xff]
    %v498 = vld [vmem:[#allocation7 + $0xab0] sm:$0xff]
    %v499 = vld [vmem:[#allocation7 + $0xab8] sm:$0xff]
    %v500 = vld [vmem:[#allocation7 + $0xac0] sm:$0xff]
    %v501 = vld [vmem:[#allocation7 + $0xac8] sm:$0xff]
    %v502 = vld [vmem:[#allocation7 + $0xad0] sm:$0xff]
    %v503 = vld [vmem:[#allocation7 + $0xad8] sm:$0xff]
    %v504 = vld [vmem:[#allocation7 + $0xae0] sm:$0xff]
    %v505 = vld [vmem:[#allocation7 + $0xae8] sm:$0xff]
    %v506 = vld [vmem:[#allocation7 + $0xaf0] sm:$0xff]
    %v507 = vld [vmem:[#allocation7 + $0xaf8] sm:$0xff]
    %v508 = vld [vmem:[#allocation7 + $0xb00] sm:$0xff]
    %v509 = vld [vmem:[#allocation7 + $0xb08] sm:$0xff]
    %v510 = vld [vmem:[#allocation7 + $0xb10] sm:$0xff]
    %v511 = vld [vmem:[#allocation7 + $0xb18] sm:$0xff]
    %v512 = vld [vmem:[#allocation7 + $0xb20] sm:$0xff]
    %v513 = vld [vmem:[#allocation7 + $0xb28] sm:$0xff]
    %v514 = vld [vmem:[#allocation7 + $0xb30] sm:$0xff]
    %v515 = vld [vmem:[#allocation7 + $0xb38] sm:$0xff]
    %v516 = vld [vmem:[#allocation7 + $0xb40] sm:$0xff]
    %v517 = vld [vmem:[#allocation7 + $0xb48] sm:$0xff]
    %v518 = vld [vmem:[#allocation7 + $0xb50] sm:$0xff]
    %v519 = vld [vmem:[#allocation7 + $0xb58] sm:$0xff]
    %v520 = vld [vmem:[#allocation7 + $0xb60] sm:$0xff]
    %v521 = vld [vmem:[#allocation7 + $0xb68] sm:$0xff]
    %v522 = vld [vmem:[#allocation7 + $0xb70] sm:$0xff]
    %v523 = vld [vmem:[#allocation7 + $0xb78] sm:$0xff]
    %v524 = vld [vmem:[#allocation7 + $0xb80] sm:$0xff]
    %v525 = vld [vmem:[#allocation7 + $0xb88] sm:$0xff]
    %v526 = vld [vmem:[#allocation7 + $0xb90] sm:$0xff]
    %v527 = vld [vmem:[#allocation7 + $0xb98] sm:$0xff]
    %v528 = vld [vmem:[#allocation7 + $0xba0] sm:$0xff]
    %v529 = vld [vmem:[#allocation7 + $0xba8] sm:$0xff]
    %v530 = vld [vmem:[#allocation7 + $0xbb0] sm:$0xff]
    %v531 = vld [vmem:[#allocation7 + $0xbb8] sm:$0xff]
    %v532 = vld [vmem:[#allocation7 + $0xbc0] sm:$0xff]
    %v533 = vld [vmem:[#allocation7 + $0xbc8] sm:$0xff]
    %v534 = vld [vmem:[#allocation7 + $0xbd0] sm:$0xff]
    %v535 = vld [vmem:[#allocation7 + $0xbd8] sm:$0xff]
    %v536 = vld [vmem:[#allocation7 + $0xbe0] sm:$0xff]
    %v537 = vld [vmem:[#allocation7 + $0xbe8] sm:$0xff]
    %v538 = vld [vmem:[#allocation7 + $0xbf0] sm:$0xff]
    %v539 = vld [vmem:[#allocation7 + $0xbf8] sm:$0xff]
    %v540 = vld [vmem:[#allocation7 + $0xc00] sm:$0xff]
    %v541 = vld [vmem:[#allocation7 + $0xc08] sm:$0xff]
    %v542 = vld [vmem:[#allocation7 + $0xc10] sm:$0xff]
    %v543 = vld [vmem:[#allocation7 + $0xc18] sm:$0xff]
    %v544 = vld [vmem:[#allocation7 + $0xc20] sm:$0xff]
    %v545 = vld [vmem:[#allocation7 + $0xc28] sm:$0xff]
    %v546 = vld [vmem:[#allocation7 + $0xc30] sm:$0xff]
    %v547 = vld [vmem:[#allocation7 + $0xc38] sm:$0xff]
    %v548 = vld [vmem:[#allocation7 + $0xc40] sm:$0xff]
    %v549 = vld [vmem:[#allocation7 + $0xc48] sm:$0xff]
    %v550 = vld [vmem:[#allocation7 + $0xc50] sm:$0xff]
    %v551 = vld [vmem:[#allocation7 + $0xc58] sm:$0xff]
    %v552 = vld [vmem:[#allocation7 + $0xc60] sm:$0xff]
    %v553 = vld [vmem:[#allocation7 + $0xc68] sm:$0xff]
    %v554 = vld [vmem:[#allocation7 + $0xc70] sm:$0xff]
    %v555 = vld [vmem:[#allocation7 + $0xc78] sm:$0xff]
    %v556 = vld [vmem:[#allocation7 + $0xc80] sm:$0xff]
    %v557 = vld [vmem:[#allocation7 + $0xc88] sm:$0xff]
    %v558 = vld [vmem:[#allocation7 + $0xc90] sm:$0xff]
    %v559 = vld [vmem:[#allocation7 + $0xc98] sm:$0xff]
    %v560 = vld [vmem:[#allocation7 + $0xca0] sm:$0xff]
    %v561 = vld [vmem:[#allocation7 + $0xca8] sm:$0xff]
    %v562 = vld [vmem:[#allocation7 + $0xcb0] sm:$0xff]
    %v563 = vld [vmem:[#allocation7 + $0xcb8] sm:$0xff]
    %v564 = vld [vmem:[#allocation7 + $0xcc0] sm:$0xff]
    %v565 = vld [vmem:[#allocation7 + $0xcc8] sm:$0xff]
    %v566 = vld [vmem:[#allocation7 + $0xcd0] sm:$0xff]
    %v567 = vld [vmem:[#allocation7 + $0xcd8] sm:$0xff]
    %v568 = vld [vmem:[#allocation7 + $0xce0] sm:$0xff]
    %v569 = vld [vmem:[#allocation7 + $0xce8] sm:$0xff]
    %v570 = vld [vmem:[#allocation7 + $0xcf0] sm:$0xff]
    %v571 = vld [vmem:[#allocation7 + $0xcf8] sm:$0xff]
    %v572 = vld [vmem:[#allocation7 + $0xd00] sm:$0xff]
    %v573 = vld [vmem:[#allocation7 + $0xd08] sm:$0xff]
    %v574 = vld [vmem:[#allocation7 + $0xd10] sm:$0xff]
    %v575 = vld [vmem:[#allocation7 + $0xd18] sm:$0xff]
    %v576 = vld [vmem:[#allocation7 + $0xd20] sm:$0xff]
    %v577 = vld [vmem:[#allocation7 + $0xd28] sm:$0xff]
    %v578 = vld [vmem:[#allocation7 + $0xd30] sm:$0xff]
    %v579 = vld [vmem:[#allocation7 + $0xd38] sm:$0xff]
    %v580 = vld [vmem:[#allocation7 + $0xd40] sm:$0xff]
    %v581 = vld [vmem:[#allocation7 + $0xd48] sm:$0xff]
    %v582 = vld [vmem:[#allocation7 + $0xd50] sm:$0xff]
    %v583 = vld [vmem:[#allocation7 + $0xd58] sm:$0xff]
    %v584 = vld [vmem:[#allocation7 + $0xd60] sm:$0xff]
    %v585 = vld [vmem:[#allocation7 + $0xd68] sm:$0xff]
    %v586 = vld [vmem:[#allocation7 + $0xd70] sm:$0xff]
    %v587 = vld [vmem:[#allocation7 + $0xd78] sm:$0xff]
    %v588 = vld [vmem:[#allocation7 + $0xd80] sm:$0xff]
    %v589 = vld [vmem:[#allocation7 + $0xd88] sm:$0xff]
    %v590 = vld [vmem:[#allocation7 + $0xd90] sm:$0xff]
    %v591 = vld [vmem:[#allocation7 + $0xd98] sm:$0xff]
    %v592 = vld [vmem:[#allocation7 + $0xda0] sm:$0xff]
    %v593 = vld [vmem:[#allocation7 + $0xda8] sm:$0xff]
    %v594 = vld [vmem:[#allocation7 + $0xdb0] sm:$0xff]
    %v595 = vld [vmem:[#allocation7 + $0xdb8] sm:$0xff]
    %v596 = vld [vmem:[#allocation7 + $0xdc0] sm:$0xff]
    %v597 = vld [vmem:[#allocation7 + $0xdc8] sm:$0xff]
    %v598 = vld [vmem:[#allocation7 + $0xdd0] sm:$0xff]
    %v599 = vld [vmem:[#allocation7 + $0xdd8] sm:$0xff]
    %v600 = vld [vmem:[#allocation7 + $0xde0] sm:$0xff]
    %v601 = vld [vmem:[#allocation7 + $0xde8] sm:$0xff]
    %v602 = vld [vmem:[#allocation7 + $0xdf0] sm:$0xff]
    %v603 = vld [vmem:[#allocation7 + $0xdf8] sm:$0xff]
    %v604 = vld [vmem:[#allocation7 + $0xe00] sm:$0xff]
    %v605 = vld [vmem:[#allocation7 + $0xe08] sm:$0xff]
    %v606 = vld [vmem:[#allocation7 + $0xe10] sm:$0xff]
    %v607 = vld [vmem:[#allocation7 + $0xe18] sm:$0xff]
    %v608 = vld [vmem:[#allocation7 + $0xe20] sm:$0xff]
    %v609 = vld [vmem:[#allocation7 + $0xe28] sm:$0xff]
    %v610 = vld [vmem:[#allocation7 + $0xe30] sm:$0xff]
    %v611 = vld [vmem:[#allocation7 + $0xe38] sm:$0xff]
    %v612 = vld [vmem:[#allocation7 + $0xe40] sm:$0xff]
    %v613 = vld [vmem:[#allocation7 + $0xe48] sm:$0xff]
    %v614 = vld [vmem:[#allocation7 + $0xe50] sm:$0xff]
    %v615 = vld [vmem:[#allocation7 + $0xe58] sm:$0xff]
    %v616 = vld [vmem:[#allocation7 + $0xe60] sm:$0xff]
    %v617 = vld [vmem:[#allocation7 + $0xe68] sm:$0xff]
    %v618 = vld [vmem:[#allocation7 + $0xe70] sm:$0xff]
    %v619 = vld [vmem:[#allocation7 + $0xe78] sm:$0xff]
    %v620 = vld [vmem:[#allocation7 + $0xe80] sm:$0xff]
    %v621 = vld [vmem:[#allocation7 + $0xe88] sm:$0xff]
    %v622 = vld [vmem:[#allocation7 + $0xe90] sm:$0xff]
    %v623 = vld [vmem:[#allocation7 + $0xe98] sm:$0xff]
    %v624 = vld [vmem:[#allocation7 + $0xea0] sm:$0xff]
    %v625 = vld [vmem:[#allocation7 + $0xea8] sm:$0xff]
    %v626 = vld [vmem:[#allocation7 + $0xeb0] sm:$0xff]
    %v627 = vld [vmem:[#allocation7 + $0xeb8] sm:$0xff]
    %v628 = vld [vmem:[#allocation7 + $0xec0] sm:$0xff]
    %v629 = vld [vmem:[#allocation7 + $0xec8] sm:$0xff]
    %v630 = vld [vmem:[#allocation7 + $0xed0] sm:$0xff]
    %v631 = vld [vmem:[#allocation7 + $0xed8] sm:$0xff]
    %v632 = vld [vmem:[#allocation7 + $0xee0] sm:$0xff]
    %v633 = vld [vmem:[#allocation7 + $0xee8] sm:$0xff]
    %v634 = vld [vmem:[#allocation7 + $0xef0] sm:$0xff]
    %v635 = vld [vmem:[#allocation7 + $0xef8] sm:$0xff]
    %v636 = vld [vmem:[#allocation7 + $0xf00] sm:$0xff]
    %v637 = vld [vmem:[#allocation7 + $0xf08] sm:$0xff]
    %v638 = vld [vmem:[#allocation7 + $0xf10] sm:$0xff]
    %v639 = vld [vmem:[#allocation7 + $0xf18] sm:$0xff]
    %v640 = vld [vmem:[#allocation7 + $0xf20] sm:$0xff]
    %v641 = vld [vmem:[#allocation7 + $0xf28] sm:$0xff]
    %v642 = vld [vmem:[#allocation7 + $0xf30] sm:$0xff]
    %v643 = vld [vmem:[#allocation7 + $0xf38] sm:$0xff]
    %v644 = vld [vmem:[#allocation7 + $0xf40] sm:$0xff]
    %v645 = vld [vmem:[#allocation7 + $0xf48] sm:$0xff]
    %v646 = vld [vmem:[#allocation7 + $0xf50] sm:$0xff]
    %v647 = vld [vmem:[#allocation7 + $0xf58] sm:$0xff]
    %v648 = vld [vmem:[#allocation7 + $0xf60] sm:$0xff]
    %v649 = vld [vmem:[#allocation7 + $0xf68] sm:$0xff]
    %v650 = vld [vmem:[#allocation7 + $0xf70] sm:$0xff]
    %v651 = vld [vmem:[#allocation7 + $0xf78] sm:$0xff]
    %v652 = vld [vmem:[#allocation7 + $0xf80] sm:$0xff]
    %v653 = vld [vmem:[#allocation7 + $0xf88] sm:$0xff]
    %v654 = vld [vmem:[#allocation7 + $0xf90] sm:$0xff]
    %v655 = vld [vmem:[#allocation7 + $0xf98] sm:$0xff]
    %v656 = vld [vmem:[#allocation7 + $0xfa0] sm:$0xff]
    %v657 = vld [vmem:[#allocation7 + $0xfa8] sm:$0xff]
    %v658 = vld [vmem:[#allocation7 + $0xfb0] sm:$0xff]
    %v659 = vld [vmem:[#allocation7 + $0xfb8] sm:$0xff]
    %v660 = vld [vmem:[#allocation7 + $0xfc0] sm:$0xff]
    %v661 = vld [vmem:[#allocation7 + $0xfc8] sm:$0xff]
    %v662 = vld [vmem:[#allocation7 + $0xfd0] sm:$0xff]
    %v663 = vld [vmem:[#allocation7 + $0xfd8] sm:$0xff]
    %v664 = vld [vmem:[#allocation7 + $0xfe0] sm:$0xff]
    %v665 = vld [vmem:[#allocation7 + $0xfe8] sm:$0xff]
    %v666 = vld [vmem:[#allocation7 + $0xff0] sm:$0xff]
    %v667 = vld [vmem:[#allocation7 + $0xff8] sm:$0xff]
    %v668 = vld [vmem:[#allocation7 + $0x1000] sm:$0xff]
    %v669 = vld [vmem:[#allocation7 + $0x1008] sm:$0xff]
    %v670 = vld [vmem:[#allocation7 + $0x1010] sm:$0xff]
    %v671 = vld [vmem:[#allocation7 + $0x1018] sm:$0xff]
    %v672 = vld [vmem:[#allocation7 + $0x1020] sm:$0xff]
    %v673 = vld [vmem:[#allocation7 + $0x1028] sm:$0xff]
    %v674 = vld [vmem:[#allocation7 + $0x1030] sm:$0xff]
    %v675 = vld [vmem:[#allocation7 + $0x1038] sm:$0xff]
    %v676 = vld [vmem:[#allocation7 + $0x1040] sm:$0xff]
    %v677 = vld [vmem:[#allocation7 + $0x1048] sm:$0xff]
    %v678 = vld [vmem:[#allocation7 + $0x1050] sm:$0xff]
    %v679 = vld [vmem:[#allocation7 + $0x1058] sm:$0xff]
    %v680 = vld [vmem:[#allocation7 + $0x1060] sm:$0xff]
    %v681 = vld [vmem:[#allocation7 + $0x1068] sm:$0xff]
    %v682 = vld [vmem:[#allocation7 + $0x1070] sm:$0xff]
    %v683 = vld [vmem:[#allocation7 + $0x1078] sm:$0xff]
    %v684 = vld [vmem:[#allocation7 + $0x1080] sm:$0xff]
    %v685 = vld [vmem:[#allocation7 + $0x1088] sm:$0xff]
    %v686 = vld [vmem:[#allocation7 + $0x1090] sm:$0xff]
    %v687 = vld [vmem:[#allocation7 + $0x1098] sm:$0xff]
    %v688 = vld [vmem:[#allocation7 + $0x10a0] sm:$0xff]
    %v689 = vld [vmem:[#allocation7 + $0x10a8] sm:$0xff]
    %v690 = vld [vmem:[#allocation7 + $0x10b0] sm:$0xff]
    %v691 = vld [vmem:[#allocation7 + $0x10b8] sm:$0xff]
    %v692 = vld [vmem:[#allocation7 + $0x10c0] sm:$0xff]
    %v693 = vld [vmem:[#allocation7 + $0x10c8] sm:$0xff]
    %v694 = vld [vmem:[#allocation7 + $0x10d0] sm:$0xff]
    %v695 = vld [vmem:[#allocation7 + $0x10d8] sm:$0xff]
    %v696 = vld [vmem:[#allocation7 + $0x10e0] sm:$0xff]
    %v697 = vld [vmem:[#allocation7 + $0x10e8] sm:$0xff]
    %v698 = vld [vmem:[#allocation7 + $0x10f0] sm:$0xff]
    %v699 = vld [vmem:[#allocation7 + $0x10f8] sm:$0xff]
    %v700 = vld [vmem:[#allocation8] ss:$8 sm:$0xf]
    %s701 = scalar_lea.vmem [#allocation8], 1
    %v702 = vld [vmem:[%s701] ss:$8 sm:$0xf]
    %s703 = scalar_lea.vmem [#allocation8], 2
    %v704 = vld [vmem:[%s703] ss:$8 sm:$0xf]
    %s705 = scalar_lea.vmem [#allocation8], 3
    %v706 = vld [vmem:[%s705] ss:$8 sm:$0xf]
    %s707 = scalar_lea.vmem [#allocation8], 4
    %v708 = vld [vmem:[%s707] ss:$8 sm:$0xf]
    %v710 = vlaneseq
    %v711 = vshrl.u32 %v710, 7
    %v712 = vsub.s32 0, %v711
    %v713 = vrot.slane %v700, %v712
    %v714 = vlaneseq
    %v715 = vshrl.u32 %v714, 7
    %v716 = vsub.s32 1, %v715
    %v717 = vrot.slane %v700, %v716
    %v718 = vlaneseq
    %v719 = vshrl.u32 %v718, 7
    %v720 = vsub.s32 2, %v719
    %v721 = vrot.slane %v700, %v720
    %v722 = vlaneseq
    %v723 = vshrl.u32 %v722, 7
    %v724 = vsub.s32 3, %v723
    %v725 = vrot.slane %v700, %v724
    %v730 = vsel %vm154, %v149, 0
    %732 = vmatprep.subr.mxu0 %v157
    %733 = vmatpush1.msra.mxu0 %v156
    %734 = vmatprep.subr.mxu0 %v161
    %735 = vmatpush1.msra.mxu0 %v160
    %736 = vmatprep.subr.mxu0 %v165
    %737 = vmatpush1.msra.mxu0 %v164
    %738 = vmatprep.subr.mxu0 %v169
    %739 = vmatpush1.msra.mxu0 %v168
    %740 = vmatprep.subr.mxu0 %v173
    %741 = vmatpush1.msra.mxu0 %v172
    %742 = vmatprep.subr.mxu0 %v177
    %743 = vmatpush1.msra.mxu0 %v176
    %744 = vmatprep.subr.mxu0 %v181
    %745 = vmatpush1.msra.mxu0 %v180
    %746 = vmatprep.subr.mxu0 %v185
    %747 = vmatpush1.msra.mxu0 %v184
    %748 = vmatprep.subr.mxu0 0.0
    %749 = vmatpush1.msra.mxu0 0.0
    %750 = vmatprep.subr.mxu0 0.0
    %751 = vmatpush1.msra.mxu0 0.0
    %752 = vmatprep.subr.mxu0 0.0
    %753 = vmatpush1.msra.mxu0 0.0
    %754 = vmatprep.subr.mxu0 0.0
    %755 = vmatpush1.msra.mxu0 0.0
    %756 = vmatprep.subr.mxu0 0.0
    %757 = vmatpush1.msra.mxu0 0.0
    %758 = vmatprep.subr.mxu0 0.0
    %759 = vmatpush1.msra.mxu0 0.0
    %760 = vmatprep.subr.mxu0 0.0
    %761 = vmatpush1.msra.mxu0 0.0
    %762 = vmatprep.subr.mxu0 0.0
    %763 = vmatpush1.msra.mxu0 0.0
    %764 = vmatprep.subr.mxu0 0.0
    %765 = vmatpush1.msra.mxu0 0.0
    %766 = vmatprep.subr.mxu0 0.0
    %767 = vmatpush1.msra.mxu0 0.0
    %768 = vmatprep.subr.mxu0 0.0
    %769 = vmatpush1.msra.mxu0 0.0
    %770 = vmatprep.subr.mxu0 0.0
    %771 = vmatpush1.msra.mxu0 0.0
    %772 = vmatprep.subr.mxu0 0.0
    %773 = vmatpush1.msra.mxu0 0.0
    %774 = vmatprep.subr.mxu0 0.0
    %775 = vmatpush1.msra.mxu0 0.0
    %776 = vmatprep.subr.mxu0 0.0
    %777 = vmatpush1.msra.mxu0 0.0
    %778 = vmatprep.subr.mxu0 0.0
    %779 = vmatpush1.msra.mxu0 0.0
    %780 = vmatprep.subr.mxu0 0.0
    %781 = vmatpush1.msra.mxu0 0.0
    %782 = vmatprep.subr.mxu0 0.0
    %783 = vmatpush1.msra.mxu0 0.0
    %784 = vmatprep.subr.mxu0 0.0
    %785 = vmatpush1.msra.mxu0 0.0
    %786 = vmatprep.subr.mxu0 0.0
    %787 = vmatpush1.msra.mxu0 0.0
    %788 = vmatprep.subr.mxu0 0.0
    %789 = vmatpush1.msra.mxu0 0.0
    %790 = vmatprep.subr.mxu0 0.0
    %791 = vmatpush1.msra.mxu0 0.0
    %792 = vmatprep.subr.mxu0 0.0
    %793 = vmatpush1.msra.mxu0 0.0
    %794 = vmatprep.subr.mxu0 0.0
    %795 = vmatpush1.msra.mxu0 0.0
    %796 = vmatprep.mubr.f32.mxu0 0.0
    %797 = vmatmul.mubr.f32.gmra.mrb[0].mxu0 %v730
    %v798 = vpop.f32.mrb[0].mxu0
    %v799 = vadd.f32 %v713, %v798
    %v800 = vpop.f32.mrb[0].mxu0
    %v801 = vadd.f32 %v717, %v800
    %802 = vdwg.mxu0
    %803 = vmatprep.subr.mxu0 %v159
    %804 = vmatpush1.msra.mxu0 %v158
    %805 = vmatprep.subr.mxu0 %v163
    %806 = vmatpush1.msra.mxu0 %v162
    %807 = vmatprep.subr.mxu0 %v167
    %808 = vmatpush1.msra.mxu0 %v166
    %809 = vmatprep.subr.mxu0 %v171
    %810 = vmatpush1.msra.mxu0 %v170
    %811 = vmatprep.subr.mxu0 %v175
    %812 = vmatpush1.msra.mxu0 %v174
    %813 = vmatprep.subr.mxu0 %v179
    %814 = vmatpush1.msra.mxu0 %v178
    %815 = vmatprep.subr.mxu0 %v183
    %816 = vmatpush1.msra.mxu0 %v182
    %817 = vmatprep.subr.mxu0 %v187
    %818 = vmatpush1.msra.mxu0 %v186
    %819 = vmatprep.subr.mxu0 0.0
    %820 = vmatpush1.msra.mxu0 0.0
    %821 = vmatprep.subr.mxu0 0.0
    %822 = vmatpush1.msra.mxu0 0.0
    %823 = vmatprep.subr.mxu0 0.0
    %824 = vmatpush1.msra.mxu0 0.0
    %825 = vmatprep.subr.mxu0 0.0
    %826 = vmatpush1.msra.mxu0 0.0
    %827 = vmatprep.subr.mxu0 0.0
    %828 = vmatpush1.msra.mxu0 0.0
    %829 = vmatprep.subr.mxu0 0.0
    %830 = vmatpush1.msra.mxu0 0.0
    %831 = vmatprep.subr.mxu0 0.0
    %832 = vmatpush1.msra.mxu0 0.0
    %833 = vmatprep.subr.mxu0 0.0
    %834 = vmatpush1.msra.mxu0 0.0
    %835 = vmatprep.subr.mxu0 0.0
    %836 = vmatpush1.msra.mxu0 0.0
    %837 = vmatprep.subr.mxu0 0.0
    %838 = vmatpush1.msra.mxu0 0.0
    %839 = vmatprep.subr.mxu0 0.0
    %840 = vmatpush1.msra.mxu0 0.0
    %841 = vmatprep.subr.mxu0 0.0
    %842 = vmatpush1.msra.mxu0 0.0
    %843 = vmatprep.subr.mxu0 0.0
    %844 = vmatpush1.msra.mxu0 0.0
    %845 = vmatprep.subr.mxu0 0.0
    %846 = vmatpush1.msra.mxu0 0.0
    %847 = vmatprep.subr.mxu0 0.0
    %848 = vmatpush1.msra.mxu0 0.0
    %849 = vmatprep.subr.mxu0 0.0
    %850 = vmatpush1.msra.mxu0 0.0
    %851 = vmatprep.subr.mxu0 0.0
    %852 = vmatpush1.msra.mxu0 0.0
    %853 = vmatprep.subr.mxu0 0.0
    %854 = vmatpush1.msra.mxu0 0.0
    %855 = vmatprep.subr.mxu0 0.0
    %856 = vmatpush1.msra.mxu0 0.0
    %857 = vmatprep.subr.mxu0 0.0
    %858 = vmatpush1.msra.mxu0 0.0
    %859 = vmatprep.subr.mxu0 0.0
    %860 = vmatpush1.msra.mxu0 0.0
    %861 = vmatprep.subr.mxu0 0.0
    %862 = vmatpush1.msra.mxu0 0.0
    %863 = vmatprep.subr.mxu0 0.0
    %864 = vmatpush1.msra.mxu0 0.0
    %865 = vmatprep.subr.mxu0 0.0
    %866 = vmatpush1.msra.mxu0 0.0
    %867 = vmatprep.mubr.f32.mxu0 0.0
    %868 = vmatmul.mubr.f32.gmra.mrb[0].mxu0 %v730
    %v869 = vpop.f32.mrb[0].mxu0
    %v870 = vadd.f32 %v721, %v869
    %v871 = vpop.f32.mrb[0].mxu0
    %v872 = vadd.f32 %v725, %v871
    %873 = vdwg.mxu0
    %v874 = vadd.f32 %v799, %v155
    %v875 = vadd.f32 %v801, %v155
    %v876 = vadd.f32 %v870, %v155
    %v877 = vadd.f32 %v872, %v155
    %v878 = vmax.f32 %v874, 0.0
    %v879 = vmax.f32 %v875, 0.0
    %v880 = vmax.f32 %v876, 0.0
    %v881 = vmax.f32 %v877, 0.0
    %v883 = vlaneseq
    %v884 = vshrl.u32 %v883, 7
    %v885 = vsub.s32 0, %v884
    %v886 = vrot.slane %v702, %v885
    %v887 = vlaneseq
    %v888 = vshrl.u32 %v887, 7
    %v889 = vsub.s32 1, %v888
    %v890 = vrot.slane %v702, %v889
    %v891 = vlaneseq
    %v892 = vshrl.u32 %v891, 7
    %v893 = vsub.s32 2, %v892
    %v894 = vrot.slane %v702, %v893
    %v895 = vlaneseq
    %v896 = vshrl.u32 %v895, 7
    %v897 = vsub.s32 3, %v896
    %v898 = vrot.slane %v702, %v897
    %903 = vmatprep.subr.mxu0 %v189
    %904 = vmatpush1.msra.mxu0 %v188
    %905 = vmatprep.subr.mxu0 %v193
    %906 = vmatpush1.msra.mxu0 %v192
    %907 = vmatprep.subr.mxu0 %v197
    %908 = vmatpush1.msra.mxu0 %v196
    %909 = vmatprep.subr.mxu0 %v201
    %910 = vmatpush1.msra.mxu0 %v200
    %911 = vmatprep.subr.mxu0 %v205
    %912 = vmatpush1.msra.mxu0 %v204
    %913 = vmatprep.subr.mxu0 %v209
    %914 = vmatpush1.msra.mxu0 %v208
    %915 = vmatprep.subr.mxu0 %v213
    %916 = vmatpush1.msra.mxu0 %v212
    %917 = vmatprep.subr.mxu0 %v217
    %918 = vmatpush1.msra.mxu0 %v216
    %919 = vmatprep.subr.mxu0 %v221
    %920 = vmatpush1.msra.mxu0 %v220
    %921 = vmatprep.subr.mxu0 %v225
    %922 = vmatpush1.msra.mxu0 %v224
    %923 = vmatprep.subr.mxu0 %v229
    %924 = vmatpush1.msra.mxu0 %v228
    %925 = vmatprep.subr.mxu0 %v233
    %926 = vmatpush1.msra.mxu0 %v232
    %927 = vmatprep.subr.mxu0 %v237
    %928 = vmatpush1.msra.mxu0 %v236
    %929 = vmatprep.subr.mxu0 %v241
    %930 = vmatpush1.msra.mxu0 %v240
    %931 = vmatprep.subr.mxu0 %v245
    %932 = vmatpush1.msra.mxu0 %v244
    %933 = vmatprep.subr.mxu0 %v249
    %934 = vmatpush1.msra.mxu0 %v248
    %935 = vmatprep.subr.mxu0 %v253
    %936 = vmatpush1.msra.mxu0 %v252
    %937 = vmatprep.subr.mxu0 %v257
    %938 = vmatpush1.msra.mxu0 %v256
    %939 = vmatprep.subr.mxu0 %v261
    %940 = vmatpush1.msra.mxu0 %v260
    %941 = vmatprep.subr.mxu0 %v265
    %942 = vmatpush1.msra.mxu0 %v264
    %943 = vmatprep.subr.mxu0 %v269
    %944 = vmatpush1.msra.mxu0 %v268
    %945 = vmatprep.subr.mxu0 %v273
    %946 = vmatpush1.msra.mxu0 %v272
    %947 = vmatprep.subr.mxu0 %v277
    %948 = vmatpush1.msra.mxu0 %v276
    %949 = vmatprep.subr.mxu0 %v281
    %950 = vmatpush1.msra.mxu0 %v280
    %951 = vmatprep.subr.mxu0 %v285
    %952 = vmatpush1.msra.mxu0 %v284
    %953 = vmatprep.subr.mxu0 %v289
    %954 = vmatpush1.msra.mxu0 %v288
    %955 = vmatprep.subr.mxu0 %v293
    %956 = vmatpush1.msra.mxu0 %v292
    %957 = vmatprep.subr.mxu0 %v297
    %958 = vmatpush1.msra.mxu0 %v296
    %959 = vmatprep.subr.mxu0 %v301
    %960 = vmatpush1.msra.mxu0 %v300
    %961 = vmatprep.subr.mxu0 %v305
    %962 = vmatpush1.msra.mxu0 %v304
    %963 = vmatprep.subr.mxu0 %v309
    %964 = vmatpush1.msra.mxu0 %v308
    %965 = vmatprep.subr.mxu0 %v313
    %966 = vmatpush1.msra.mxu0 %v312
    %967 = vmatprep.mubr.f32.mxu0 %v879
    %968 = vmatmul.mubr.f32.gmra.mrb[0].mxu0 %v878
    %v969 = vpop.f32.mrb[0].mxu0
    %v970 = vadd.f32 %v886, %v969
    %v971 = vpop.f32.mrb[0].mxu0
    %v972 = vadd.f32 %v890, %v971
    %973 = vdwg.mxu0
    %974 = vmatprep.subr.mxu0 %v317
    %975 = vmatpush1.msra.mxu0 %v316
    %976 = vmatprep.subr.mxu0 %v321
    %977 = vmatpush1.msra.mxu0 %v320
    %978 = vmatprep.subr.mxu0 %v325
    %979 = vmatpush1.msra.mxu0 %v324
    %980 = vmatprep.subr.mxu0 %v329
    %981 = vmatpush1.msra.mxu0 %v328
    %982 = vmatprep.subr.mxu0 %v333
    %983 = vmatpush1.msra.mxu0 %v332
    %984 = vmatprep.subr.mxu0 %v337
    %985 = vmatpush1.msra.mxu0 %v336
    %986 = vmatprep.subr.mxu0 %v341
    %987 = vmatpush1.msra.mxu0 %v340
    %988 = vmatprep.subr.mxu0 %v345
    %989 = vmatpush1.msra.mxu0 %v344
    %990 = vmatprep.subr.mxu0 %v349
    %991 = vmatpush1.msra.mxu0 %v348
    %992 = vmatprep.subr.mxu0 %v353
    %993 = vmatpush1.msra.mxu0 %v352
    %994 = vmatprep.subr.mxu0 %v357
    %995 = vmatpush1.msra.mxu0 %v356
    %996 = vmatprep.subr.mxu0 %v361
    %997 = vmatpush1.msra.mxu0 %v360
    %998 = vmatprep.subr.mxu0 %v365
    %999 = vmatpush1.msra.mxu0 %v364
    %1000 = vmatprep.subr.mxu0 %v369
    %1001 = vmatpush1.msra.mxu0 %v368
    %1002 = vmatprep.subr.mxu0 %v373
    %1003 = vmatpush1.msra.mxu0 %v372
    %1004 = vmatprep.subr.mxu0 %v377
    %1005 = vmatpush1.msra.mxu0 %v376
    %1006 = vmatprep.subr.mxu0 %v381
    %1007 = vmatpush1.msra.mxu0 %v380
    %1008 = vmatprep.subr.mxu0 %v385
    %1009 = vmatpush1.msra.mxu0 %v384
    %1010 = vmatprep.subr.mxu0 %v389
    %1011 = vmatpush1.msra.mxu0 %v388
    %1012 = vmatprep.subr.mxu0 %v393
    %1013 = vmatpush1.msra.mxu0 %v392
    %1014 = vmatprep.subr.mxu0 %v397
    %1015 = vmatpush1.msra.mxu0 %v396
    %1016 = vmatprep.subr.mxu0 %v401
    %1017 = vmatpush1.msra.mxu0 %v400
    %1018 = vmatprep.subr.mxu0 %v405
    %1019 = vmatpush1.msra.mxu0 %v404
    %1020 = vmatprep.subr.mxu0 %v409
    %1021 = vmatpush1.msra.mxu0 %v408
    %1022 = vmatprep.subr.mxu0 %v413
    %1023 = vmatpush1.msra.mxu0 %v412
    %1024 = vmatprep.subr.mxu0 %v417
    %1025 = vmatpush1.msra.mxu0 %v416
    %1026 = vmatprep.subr.mxu0 %v421
    %1027 = vmatpush1.msra.mxu0 %v420
    %1028 = vmatprep.subr.mxu0 %v425
    %1029 = vmatpush1.msra.mxu0 %v424
    %1030 = vmatprep.subr.mxu0 %v429
    %1031 = vmatpush1.msra.mxu0 %v428
    %1032 = vmatprep.subr.mxu0 %v433
    %1033 = vmatpush1.msra.mxu0 %v432
    %1034 = vmatprep.subr.mxu0 %v437
    %1035 = vmatpush1.msra.mxu0 %v436
    %1036 = vmatprep.subr.mxu0 %v441
    %1037 = vmatpush1.msra.mxu0 %v440
    %1038 = vmatprep.mubr.f32.mxu0 %v881
    %1039 = vmatmul.mubr.f32.gmra.mrb[0].mxu0 %v880
    %v1040 = vpop.f32.mrb[0].mxu0
    %v1041 = vadd.f32 %v970, %v1040
    %v1042 = vpop.f32.mrb[0].mxu0
    %v1043 = vadd.f32 %v972, %v1042
    %1044 = vdwg.mxu0
    %1045 = vmatprep.subr.mxu0 %v191
    %1046 = vmatpush1.msra.mxu0 %v190
    %1047 = vmatprep.subr.mxu0 %v195
    %1048 = vmatpush1.msra.mxu0 %v194
    %1049 = vmatprep.subr.mxu0 %v199
    %1050 = vmatpush1.msra.mxu0 %v198
    %1051 = vmatprep.subr.mxu0 %v203
    %1052 = vmatpush1.msra.mxu0 %v202
    %1053 = vmatprep.subr.mxu0 %v207
    %1054 = vmatpush1.msra.mxu0 %v206
    %1055 = vmatprep.subr.mxu0 %v211
    %1056 = vmatpush1.msra.mxu0 %v210
    %1057 = vmatprep.subr.mxu0 %v215
    %1058 = vmatpush1.msra.mxu0 %v214
    %1059 = vmatprep.subr.mxu0 %v219
    %1060 = vmatpush1.msra.mxu0 %v218
    %1061 = vmatprep.subr.mxu0 %v223
    %1062 = vmatpush1.msra.mxu0 %v222
    %1063 = vmatprep.subr.mxu0 %v227
    %1064 = vmatpush1.msra.mxu0 %v226
    %1065 = vmatprep.subr.mxu0 %v231
    %1066 = vmatpush1.msra.mxu0 %v230
    %1067 = vmatprep.subr.mxu0 %v235
    %1068 = vmatpush1.msra.mxu0 %v234
    %1069 = vmatprep.subr.mxu0 %v239
    %1070 = vmatpush1.msra.mxu0 %v238
    %1071 = vmatprep.subr.mxu0 %v243
    %1072 = vmatpush1.msra.mxu0 %v242
    %1073 = vmatprep.subr.mxu0 %v247
    %1074 = vmatpush1.msra.mxu0 %v246
    %1075 = vmatprep.subr.mxu0 %v251
    %1076 = vmatpush1.msra.mxu0 %v250
    %1077 = vmatprep.subr.mxu0 %v255
    %1078 = vmatpush1.msra.mxu0 %v254
    %1079 = vmatprep.subr.mxu0 %v259
    %1080 = vmatpush1.msra.mxu0 %v258
    %1081 = vmatprep.subr.mxu0 %v263
    %1082 = vmatpush1.msra.mxu0 %v262
    %1083 = vmatprep.subr.mxu0 %v267
    %1084 = vmatpush1.msra.mxu0 %v266
    %1085 = vmatprep.subr.mxu0 %v271
    %1086 = vmatpush1.msra.mxu0 %v270
    %1087 = vmatprep.subr.mxu0 %v275
    %1088 = vmatpush1.msra.mxu0 %v274
    %1089 = vmatprep.subr.mxu0 %v279
    %1090 = vmatpush1.msra.mxu0 %v278
    %1091 = vmatprep.subr.mxu0 %v283
    %1092 = vmatpush1.msra.mxu0 %v282
    %1093 = vmatprep.subr.mxu0 %v287
    %1094 = vmatpush1.msra.mxu0 %v286
    %1095 = vmatprep.subr.mxu0 %v291
    %1096 = vmatpush1.msra.mxu0 %v290
    %1097 = vmatprep.subr.mxu0 %v295
    %1098 = vmatpush1.msra.mxu0 %v294
    %1099 = vmatprep.subr.mxu0 %v299
    %1100 = vmatpush1.msra.mxu0 %v298
    %1101 = vmatprep.subr.mxu0 %v303
    %1102 = vmatpush1.msra.mxu0 %v302
    %1103 = vmatprep.subr.mxu0 %v307
    %1104 = vmatpush1.msra.mxu0 %v306
    %1105 = vmatprep.subr.mxu0 %v311
    %1106 = vmatpush1.msra.mxu0 %v310
    %1107 = vmatprep.subr.mxu0 %v315
    %1108 = vmatpush1.msra.mxu0 %v314
    %1109 = vmatprep.mubr.f32.mxu0 %v879
    %1110 = vmatmul.mubr.f32.gmra.mrb[0].mxu0 %v878
    %v1111 = vpop.f32.mrb[0].mxu0
    %v1112 = vadd.f32 %v894, %v1111
    %v1113 = vpop.f32.mrb[0].mxu0
    %v1114 = vadd.f32 %v898, %v1113
    %1115 = vdwg.mxu0
    %1116 = vmatprep.subr.mxu0 %v319
    %1117 = vmatpush1.msra.mxu0 %v318
    %1118 = vmatprep.subr.mxu0 %v323
    %1119 = vmatpush1.msra.mxu0 %v322
    %1120 = vmatprep.subr.mxu0 %v327
    %1121 = vmatpush1.msra.mxu0 %v326
    %1122 = vmatprep.subr.mxu0 %v331
    %1123 = vmatpush1.msra.mxu0 %v330
    %1124 = vmatprep.subr.mxu0 %v335
    %1125 = vmatpush1.msra.mxu0 %v334
    %1126 = vmatprep.subr.mxu0 %v339
    %1127 = vmatpush1.msra.mxu0 %v338
    %1128 = vmatprep.subr.mxu0 %v343
    %1129 = vmatpush1.msra.mxu0 %v342
    %1130 = vmatprep.subr.mxu0 %v347
    %1131 = vmatpush1.msra.mxu0 %v346
    %1132 = vmatprep.subr.mxu0 %v351
    %1133 = vmatpush1.msra.mxu0 %v350
    %1134 = vmatprep.subr.mxu0 %v355
    %1135 = vmatpush1.msra.mxu0 %v354
    %1136 = vmatprep.subr.mxu0 %v359
    %1137 = vmatpush1.msra.mxu0 %v358
    %1138 = vmatprep.subr.mxu0 %v363
    %1139 = vmatpush1.msra.mxu0 %v362
    %1140 = vmatprep.subr.mxu0 %v367
    %1141 = vmatpush1.msra.mxu0 %v366
    %1142 = vmatprep.subr.mxu0 %v371
    %1143 = vmatpush1.msra.mxu0 %v370
    %1144 = vmatprep.subr.mxu0 %v375
    %1145 = vmatpush1.msra.mxu0 %v374
    %1146 = vmatprep.subr.mxu0 %v379
    %1147 = vmatpush1.msra.mxu0 %v378
    %1148 = vmatprep.subr.mxu0 %v383
    %1149 = vmatpush1.msra.mxu0 %v382
    %1150 = vmatprep.subr.mxu0 %v387
    %1151 = vmatpush1.msra.mxu0 %v386
    %1152 = vmatprep.subr.mxu0 %v391
    %1153 = vmatpush1.msra.mxu0 %v390
    %1154 = vmatprep.subr.mxu0 %v395
    %1155 = vmatpush1.msra.mxu0 %v394
    %1156 = vmatprep.subr.mxu0 %v399
    %1157 = vmatpush1.msra.mxu0 %v398
    %1158 = vmatprep.subr.mxu0 %v403
    %1159 = vmatpush1.msra.mxu0 %v402
    %1160 = vmatprep.subr.mxu0 %v407
    %1161 = vmatpush1.msra.mxu0 %v406
    %1162 = vmatprep.subr.mxu0 %v411
    %1163 = vmatpush1.msra.mxu0 %v410
    %1164 = vmatprep.subr.mxu0 %v415
    %1165 = vmatpush1.msra.mxu0 %v414
    %1166 = vmatprep.subr.mxu0 %v419
    %1167 = vmatpush1.msra.mxu0 %v418
    %1168 = vmatprep.subr.mxu0 %v423
    %1169 = vmatpush1.msra.mxu0 %v422
    %1170 = vmatprep.subr.mxu0 %v427
    %1171 = vmatpush1.msra.mxu0 %v426
    %1172 = vmatprep.subr.mxu0 %v431
    %1173 = vmatpush1.msra.mxu0 %v430
    %1174 = vmatprep.subr.mxu0 %v435
    %1175 = vmatpush1.msra.mxu0 %v434
    %1176 = vmatprep.subr.mxu0 %v439
    %1177 = vmatpush1.msra.mxu0 %v438
    %1178 = vmatprep.subr.mxu0 %v443
    %1179 = vmatpush1.msra.mxu0 %v442
    %1180 = vmatprep.mubr.f32.mxu0 %v881
    %1181 = vmatmul.mubr.f32.gmra.mrb[0].mxu0 %v880
    %v1182 = vpop.f32.mrb[0].mxu0
    %v1183 = vadd.f32 %v1112, %v1182
    %v1184 = vpop.f32.mrb[0].mxu0
    %v1185 = vadd.f32 %v1114, %v1184
    %1186 = vdwg.mxu0
    %v1187 = vadd.f32 %v1041, %v878
    %v1188 = vadd.f32 %v1043, %v879
    %v1189 = vadd.f32 %v1183, %v880
    %v1190 = vadd.f32 %v1185, %v881
    %v1191 = vmax.f32 %v1187, 0.0
    %v1192 = vmax.f32 %v1188, 0.0
    %v1193 = vmax.f32 %v1189, 0.0
    %v1194 = vmax.f32 %v1190, 0.0
    %v1196 = vlaneseq
    %v1197 = vshrl.u32 %v1196, 7
    %v1198 = vsub.s32 0, %v1197
    %v1199 = vrot.slane %v704, %v1198
    %v1200 = vlaneseq
    %v1201 = vshrl.u32 %v1200, 7
    %v1202 = vsub.s32 1, %v1201
    %v1203 = vrot.slane %v704, %v1202
    %v1204 = vlaneseq
    %v1205 = vshrl.u32 %v1204, 7
    %v1206 = vsub.s32 2, %v1205
    %v1207 = vrot.slane %v704, %v1206
    %v1208 = vlaneseq
    %v1209 = vshrl.u32 %v1208, 7
    %v1210 = vsub.s32 3, %v1209
    %v1211 = vrot.slane %v704, %v1210
    %1216 = vmatprep.subr.mxu0 %v445
    %1217 = vmatpush1.msra.mxu0 %v444
    %1218 = vmatprep.subr.mxu0 %v449
    %1219 = vmatpush1.msra.mxu0 %v448
    %1220 = vmatprep.subr.mxu0 %v453
    %1221 = vmatpush1.msra.mxu0 %v452
    %1222 = vmatprep.subr.mxu0 %v457
    %1223 = vmatpush1.msra.mxu0 %v456
    %1224 = vmatprep.subr.mxu0 %v461
    %1225 = vmatpush1.msra.mxu0 %v460
    %1226 = vmatprep.subr.mxu0 %v465
    %1227 = vmatpush1.msra.mxu0 %v464
    %1228 = vmatprep.subr.mxu0 %v469
    %1229 = vmatpush1.msra.mxu0 %v468
    %1230 = vmatprep.subr.mxu0 %v473
    %1231 = vmatpush1.msra.mxu0 %v472
    %1232 = vmatprep.subr.mxu0 %v477
    %1233 = vmatpush1.msra.mxu0 %v476
    %1234 = vmatprep.subr.mxu0 %v481
    %1235 = vmatpush1.msra.mxu0 %v480
    %1236 = vmatprep.subr.mxu0 %v485
    %1237 = vmatpush1.msra.mxu0 %v484
    %1238 = vmatprep.subr.mxu0 %v489
    %1239 = vmatpush1.msra.mxu0 %v488
    %1240 = vmatprep.subr.mxu0 %v493
    %1241 = vmatpush1.msra.mxu0 %v492
    %1242 = vmatprep.subr.mxu0 %v497
    %1243 = vmatpush1.msra.mxu0 %v496
    %1244 = vmatprep.subr.mxu0 %v501
    %1245 = vmatpush1.msra.mxu0 %v500
    %1246 = vmatprep.subr.mxu0 %v505
    %1247 = vmatpush1.msra.mxu0 %v504
    %1248 = vmatprep.subr.mxu0 %v509
    %1249 = vmatpush1.msra.mxu0 %v508
    %1250 = vmatprep.subr.mxu0 %v513
    %1251 = vmatpush1.msra.mxu0 %v512
    %1252 = vmatprep.subr.mxu0 %v517
    %1253 = vmatpush1.msra.mxu0 %v516
    %1254 = vmatprep.subr.mxu0 %v521
    %1255 = vmatpush1.msra.mxu0 %v520
    %1256 = vmatprep.subr.mxu0 %v525
    %1257 = vmatpush1.msra.mxu0 %v524
    %1258 = vmatprep.subr.mxu0 %v529
    %1259 = vmatpush1.msra.mxu0 %v528
    %1260 = vmatprep.subr.mxu0 %v533
    %1261 = vmatpush1.msra.mxu0 %v532
    %1262 = vmatprep.subr.mxu0 %v537
    %1263 = vmatpush1.msra.mxu0 %v536
    %1264 = vmatprep.subr.mxu0 %v541
    %1265 = vmatpush1.msra.mxu0 %v540
    %1266 = vmatprep.subr.mxu0 %v545
    %1267 = vmatpush1.msra.mxu0 %v544
    %1268 = vmatprep.subr.mxu0 %v549
    %1269 = vmatpush1.msra.mxu0 %v548
    %1270 = vmatprep.subr.mxu0 %v553
    %1271 = vmatpush1.msra.mxu0 %v552
    %1272 = vmatprep.subr.mxu0 %v557
    %1273 = vmatpush1.msra.mxu0 %v556
    %1274 = vmatprep.subr.mxu0 %v561
    %1275 = vmatpush1.msra.mxu0 %v560
    %1276 = vmatprep.subr.mxu0 %v565
    %1277 = vmatpush1.msra.mxu0 %v564
    %1278 = vmatprep.subr.mxu0 %v569
    %1279 = vmatpush1.msra.mxu0 %v568
    %1280 = vmatprep.mubr.f32.mxu0 %v1192
    %1281 = vmatmul.mubr.f32.gmra.mrb[0].mxu0 %v1191
    %v1282 = vpop.f32.mrb[0].mxu0
    %v1283 = vadd.f32 %v1199, %v1282
    %v1284 = vpop.f32.mrb[0].mxu0
    %v1285 = vadd.f32 %v1203, %v1284
    %1286 = vdwg.mxu0
    %1287 = vmatprep.subr.mxu0 %v573
    %1288 = vmatpush1.msra.mxu0 %v572
    %1289 = vmatprep.subr.mxu0 %v577
    %1290 = vmatpush1.msra.mxu0 %v576
    %1291 = vmatprep.subr.mxu0 %v581
    %1292 = vmatpush1.msra.mxu0 %v580
    %1293 = vmatprep.subr.mxu0 %v585
    %1294 = vmatpush1.msra.mxu0 %v584
    %1295 = vmatprep.subr.mxu0 %v589
    %1296 = vmatpush1.msra.mxu0 %v588
    %1297 = vmatprep.subr.mxu0 %v593
    %1298 = vmatpush1.msra.mxu0 %v592
    %1299 = vmatprep.subr.mxu0 %v597
    %1300 = vmatpush1.msra.mxu0 %v596
    %1301 = vmatprep.subr.mxu0 %v601
    %1302 = vmatpush1.msra.mxu0 %v600
    %1303 = vmatprep.subr.mxu0 %v605
    %1304 = vmatpush1.msra.mxu0 %v604
    %1305 = vmatprep.subr.mxu0 %v609
    %1306 = vmatpush1.msra.mxu0 %v608
    %1307 = vmatprep.subr.mxu0 %v613
    %1308 = vmatpush1.msra.mxu0 %v612
    %1309 = vmatprep.subr.mxu0 %v617
    %1310 = vmatpush1.msra.mxu0 %v616
    %1311 = vmatprep.subr.mxu0 %v621
    %1312 = vmatpush1.msra.mxu0 %v620
    %1313 = vmatprep.subr.mxu0 %v625
    %1314 = vmatpush1.msra.mxu0 %v624
    %1315 = vmatprep.subr.mxu0 %v629
    %1316 = vmatpush1.msra.mxu0 %v628
    %1317 = vmatprep.subr.mxu0 %v633
    %1318 = vmatpush1.msra.mxu0 %v632
    %1319 = vmatprep.subr.mxu0 %v637
    %1320 = vmatpush1.msra.mxu0 %v636
    %1321 = vmatprep.subr.mxu0 %v641
    %1322 = vmatpush1.msra.mxu0 %v640
    %1323 = vmatprep.subr.mxu0 %v645
    %1324 = vmatpush1.msra.mxu0 %v644
    %1325 = vmatprep.subr.mxu0 %v649
    %1326 = vmatpush1.msra.mxu0 %v648
    %1327 = vmatprep.subr.mxu0 %v653
    %1328 = vmatpush1.msra.mxu0 %v652
    %1329 = vmatprep.subr.mxu0 %v657
    %1330 = vmatpush1.msra.mxu0 %v656
    %1331 = vmatprep.subr.mxu0 %v661
    %1332 = vmatpush1.msra.mxu0 %v660
    %1333 = vmatprep.subr.mxu0 %v665
    %1334 = vmatpush1.msra.mxu0 %v664
    %1335 = vmatprep.subr.mxu0 %v669
    %1336 = vmatpush1.msra.mxu0 %v668
    %1337 = vmatprep.subr.mxu0 %v673
    %1338 = vmatpush1.msra.mxu0 %v672
    %1339 = vmatprep.subr.mxu0 %v677
    %1340 = vmatpush1.msra.mxu0 %v676
    %1341 = vmatprep.subr.mxu0 %v681
    %1342 = vmatpush1.msra.mxu0 %v680
    %1343 = vmatprep.subr.mxu0 %v685
    %1344 = vmatpush1.msra.mxu0 %v684
    %1345 = vmatprep.subr.mxu0 %v689
    %1346 = vmatpush1.msra.mxu0 %v688
    %1347 = vmatprep.subr.mxu0 %v693
    %1348 = vmatpush1.msra.mxu0 %v692
    %1349 = vmatprep.subr.mxu0 %v697
    %1350 = vmatpush1.msra.mxu0 %v696
    %1351 = vmatprep.mubr.f32.mxu0 %v1194
    %1352 = vmatmul.mubr.f32.gmra.mrb[0].mxu0 %v1193
    %v1353 = vpop.f32.mrb[0].mxu0
    %v1354 = vadd.f32 %v1283, %v1353
    %v1355 = vpop.f32.mrb[0].mxu0
    %v1356 = vadd.f32 %v1285, %v1355
    %1357 = vdwg.mxu0
    %1358 = vmatprep.subr.mxu0 %v447
    %1359 = vmatpush1.msra.mxu0 %v446
    %1360 = vmatprep.subr.mxu0 %v451
    %1361 = vmatpush1.msra.mxu0 %v450
    %1362 = vmatprep.subr.mxu0 %v455
    %1363 = vmatpush1.msra.mxu0 %v454
    %1364 = vmatprep.subr.mxu0 %v459
    %1365 = vmatpush1.msra.mxu0 %v458
    %1366 = vmatprep.subr.mxu0 %v463
    %1367 = vmatpush1.msra.mxu0 %v462
    %1368 = vmatprep.subr.mxu0 %v467
    %1369 = vmatpush1.msra.mxu0 %v466
    %1370 = vmatprep.subr.mxu0 %v471
    %1371 = vmatpush1.msra.mxu0 %v470
    %1372 = vmatprep.subr.mxu0 %v475
    %1373 = vmatpush1.msra.mxu0 %v474
    %1374 = vmatprep.subr.mxu0 %v479
    %1375 = vmatpush1.msra.mxu0 %v478
    %1376 = vmatprep.subr.mxu0 %v483
    %1377 = vmatpush1.msra.mxu0 %v482
    %1378 = vmatprep.subr.mxu0 %v487
    %1379 = vmatpush1.msra.mxu0 %v486
    %1380 = vmatprep.subr.mxu0 %v491
    %1381 = vmatpush1.msra.mxu0 %v490
    %1382 = vmatprep.subr.mxu0 %v495
    %1383 = vmatpush1.msra.mxu0 %v494
    %1384 = vmatprep.subr.mxu0 %v499
    %1385 = vmatpush1.msra.mxu0 %v498
    %1386 = vmatprep.subr.mxu0 %v503
    %1387 = vmatpush1.msra.mxu0 %v502
    %1388 = vmatprep.subr.mxu0 %v507
    %1389 = vmatpush1.msra.mxu0 %v506
    %1390 = vmatprep.subr.mxu0 %v511
    %1391 = vmatpush1.msra.mxu0 %v510
    %1392 = vmatprep.subr.mxu0 %v515
    %1393 = vmatpush1.msra.mxu0 %v514
    %1394 = vmatprep.subr.mxu0 %v519
    %1395 = vmatpush1.msra.mxu0 %v518
    %1396 = vmatprep.subr.mxu0 %v523
    %1397 = vmatpush1.msra.mxu0 %v522
    %1398 = vmatprep.subr.mxu0 %v527
    %1399 = vmatpush1.msra.mxu0 %v526
    %1400 = vmatprep.subr.mxu0 %v531
    %1401 = vmatpush1.msra.mxu0 %v530
    %1402 = vmatprep.subr.mxu0 %v535
    %1403 = vmatpush1.msra.mxu0 %v534
    %1404 = vmatprep.subr.mxu0 %v539
    %1405 = vmatpush1.msra.mxu0 %v538
    %1406 = vmatprep.subr.mxu0 %v543
    %1407 = vmatpush1.msra.mxu0 %v542
    %1408 = vmatprep.subr.mxu0 %v547
    %1409 = vmatpush1.msra.mxu0 %v546
    %1410 = vmatprep.subr.mxu0 %v551
    %1411 = vmatpush1.msra.mxu0 %v550
    %1412 = vmatprep.subr.mxu0 %v555
    %1413 = vmatpush1.msra.mxu0 %v554
    %1414 = vmatprep.subr.mxu0 %v559
    %1415 = vmatpush1.msra.mxu0 %v558
    %1416 = vmatprep.subr.mxu0 %v563
    %1417 = vmatpush1.msra.mxu0 %v562
    %1418 = vmatprep.subr.mxu0 %v567
    %1419 = vmatpush1.msra.mxu0 %v566
    %1420 = vmatprep.subr.mxu0 %v571
    %1421 = vmatpush1.msra.mxu0 %v570
    %1422 = vmatprep.mubr.f32.mxu0 %v1192
    %1423 = vmatmul.mubr.f32.gmra.mrb[0].mxu0 %v1191
    %v1424 = vpop.f32.mrb[0].mxu0
    %v1425 = vadd.f32 %v1207, %v1424
    %v1426 = vpop.f32.mrb[0].mxu0
    %v1427 = vadd.f32 %v1211, %v1426
    %1428 = vdwg.mxu0
    %1429 = vmatprep.subr.mxu0 %v575
    %1430 = vmatpush1.msra.mxu0 %v574
    %1431 = vmatprep.subr.mxu0 %v579
    %1432 = vmatpush1.msra.mxu0 %v578
    %1433 = vmatprep.subr.mxu0 %v583
    %1434 = vmatpush1.msra.mxu0 %v582
    %1435 = vmatprep.subr.mxu0 %v587
    %1436 = vmatpush1.msra.mxu0 %v586
    %1437 = vmatprep.subr.mxu0 %v591
    %1438 = vmatpush1.msra.mxu0 %v590
    %1439 = vmatprep.subr.mxu0 %v595
    %1440 = vmatpush1.msra.mxu0 %v594
    %1441 = vmatprep.subr.mxu0 %v599
    %1442 = vmatpush1.msra.mxu0 %v598
    %1443 = vmatprep.subr.mxu0 %v603
    %1444 = vmatpush1.msra.mxu0 %v602
    %1445 = vmatprep.subr.mxu0 %v607
    %1446 = vmatpush1.msra.mxu0 %v606
    %1447 = vmatprep.subr.mxu0 %v611
    %1448 = vmatpush1.msra.mxu0 %v610
    %1449 = vmatprep.subr.mxu0 %v615
    %1450 = vmatpush1.msra.mxu0 %v614
    %1451 = vmatprep.subr.mxu0 %v619
    %1452 = vmatpush1.msra.mxu0 %v618
    %1453 = vmatprep.subr.mxu0 %v623
    %1454 = vmatpush1.msra.mxu0 %v622
    %1455 = vmatprep.subr.mxu0 %v627
    %1456 = vmatpush1.msra.mxu0 %v626
    %1457 = vmatprep.subr.mxu0 %v631
    %1458 = vmatpush1.msra.mxu0 %v630
    %1459 = vmatprep.subr.mxu0 %v635
    %1460 = vmatpush1.msra.mxu0 %v634
    %1461 = vmatprep.subr.mxu0 %v639
    %1462 = vmatpush1.msra.mxu0 %v638
    %1463 = vmatprep.subr.mxu0 %v643
    %1464 = vmatpush1.msra.mxu0 %v642
    %1465 = vmatprep.subr.mxu0 %v647
    %1466 = vmatpush1.msra.mxu0 %v646
    %1467 = vmatprep.subr.mxu0 %v651
    %1468 = vmatpush1.msra.mxu0 %v650
    %1469 = vmatprep.subr.mxu0 %v655
    %1470 = vmatpush1.msra.mxu0 %v654
    %1471 = vmatprep.subr.mxu0 %v659
    %1472 = vmatpush1.msra.mxu0 %v658
    %1473 = vmatprep.subr.mxu0 %v663
    %1474 = vmatpush1.msra.mxu0 %v662
    %1475 = vmatprep.subr.mxu0 %v667
    %1476 = vmatpush1.msra.mxu0 %v666
    %1477 = vmatprep.subr.mxu0 %v671
    %1478 = vmatpush1.msra.mxu0 %v670
    %1479 = vmatprep.subr.mxu0 %v675
    %1480 = vmatpush1.msra.mxu0 %v674
    %1481 = vmatprep.subr.mxu0 %v679
    %1482 = vmatpush1.msra.mxu0 %v678
    %1483 = vmatprep.subr.mxu0 %v683
    %1484 = vmatpush1.msra.mxu0 %v682
    %1485 = vmatprep.subr.mxu0 %v687
    %1486 = vmatpush1.msra.mxu0 %v686
    %1487 = vmatprep.subr.mxu0 %v691
    %1488 = vmatpush1.msra.mxu0 %v690
    %1489 = vmatprep.subr.mxu0 %v695
    %1490 = vmatpush1.msra.mxu0 %v694
    %1491 = vmatprep.subr.mxu0 %v699
    %1492 = vmatpush1.msra.mxu0 %v698
    %1493 = vmatprep.mubr.f32.mxu0 %v1194
    %1494 = vmatmul.mubr.f32.gmra.mrb[0].mxu0 %v1193
    %v1495 = vpop.f32.mrb[0].mxu0
    %v1496 = vadd.f32 %v1425, %v1495
    %v1497 = vpop.f32.mrb[0].mxu0
    %v1498 = vadd.f32 %v1427, %v1497
    %1499 = vdwg.mxu0
    %v1500 = vadd.f32 %v1354, %v1191
    %v1501 = vadd.f32 %v1356, %v1192
    %v1502 = vadd.f32 %v1496, %v1193
    %v1503 = vadd.f32 %v1498, %v1194
    %v1505 = vlaneseq
    %v1506 = vshrl.u32 %v1505, 7
    %v1507 = vsub.s32 0, %v1506
    %v1508 = vrot.slane %v706, %v1507
    %v1509 = vlaneseq
    %v1510 = vshrl.u32 %v1509, 7
    %v1511 = vsub.s32 1, %v1510
    %v1512 = vrot.slane %v706, %v1511
    %v1513 = vlaneseq
    %v1514 = vshrl.u32 %v1513, 7
    %v1515 = vsub.s32 2, %v1514
    %v1516 = vrot.slane %v706, %v1515
    %v1517 = vlaneseq
    %v1518 = vshrl.u32 %v1517, 7
    %v1519 = vsub.s32 3, %v1518
    %v1520 = vrot.slane %v706, %v1519
    %v1525 = vmul.f32 %v1500, %v1508
    %v1526 = vmul.f32 %v1501, %v1512
    %v1527 = vmul.f32 %v1502, %v1516
    %v1528 = vmul.f32 %v1503, %v1520
    %v1530 = vlaneseq
    %v1531 = vshrl.u32 %v1530, 7
    %v1532 = vsub.s32 0, %v1531
    %v1533 = vrot.slane %v708, %v1532
    %v1534 = vlaneseq
    %v1535 = vshrl.u32 %v1534, 7
    %v1536 = vsub.s32 1, %v1535
    %v1537 = vrot.slane %v708, %v1536
    %v1538 = vlaneseq
    %v1539 = vshrl.u32 %v1538, 7
    %v1540 = vsub.s32 2, %v1539
    %v1541 = vrot.slane %v708, %v1540
    %v1542 = vlaneseq
    %v1543 = vshrl.u32 %v1542, 7
    %v1544 = vsub.s32 3, %v1543
    %v1545 = vrot.slane %v708, %v1544
    %v1550 = vadd.f32 %v1525, %v1533
    %v1551 = vadd.f32 %v1526, %v1537
    %v1552 = vadd.f32 %v1527, %v1541
    %v1553 = vadd.f32 %v1528, %v1545
    %v1558 = vcombine.low %v1550, %v1551
    %v1559 = vcombine.low %v1552, %v1553
    %v1561 = vunpack.c.l.s4 1966171168
    %v1562 = vunpack.c.0.s8 %v1561
    %v1563 = vlaneseq
    %v1564 = vshrl.u32 %v1563, 7
    %v1565 = vsub.s32 %v1562, %v1564
    %v1566 = vrot.slane %v1558, %v1565
    %v1568 = vunpack.c.l.s4 1966171168
    %v1569 = vunpack.c.0.s8 %v1568
    %v1570 = vlaneseq
    %v1571 = vshrl.u32 %v1570, 7
    %v1572 = vsub.s32 %v1569, %v1571
    %v1573 = vrot.slane %v1559, %v1572
    %v1574 = vcombine.low %v1566, %v1573
    %v1576 = vunpack.c.l.s4 1966171168
    %v1577 = vunpack.c.0.s8 %v1576
    %v1578 = vlaneseq
    %v1579 = vshrl.u32 %v1578, 7
    %v1580 = vsub.s32 %v1577, %v1579
    %v1581 = vrot.slane %v1574, %v1580
    %v1583 = vlaneseq
    %vm1584 = vcmp.ge.s32.totalorder %v1583, 0
    %vm1585 = vcmp.lt.s32.totalorder %v1583, 512
    %vm1586 = vmand %vm1584, %vm1585
    %1587 = vst.msk [vmem:[#allocation10] sm:$0xf] %vm1586, %v1581
    // Predicated region
    $region34: #{film_forward.1} parent=1 // pred_check
      _
    $region35: #{film_forward.1} parent=1 // pred_check_branch
      %1589 = sbr.rel (0) target = $region37
    $region36: #{film_forward.1} parent=1 // pred_region
      %s1591 = ssub.s32 64, 64
      %1592 = vsyncadd [#allocation4], %s1591
      %s1594 = sshll.u32 [#allocation10], 4
      %s1595 = int_to_ptr.vmem [resolvable:$true] %s1594
      %1597 = dma.vmem_to_hbm [thread:$0]  %s1595, 64, %s4, [#allocation4]
    $region37: #{film_forward.1} parent=1 // pred_fallthru
      _
    // Predicated region
    $region38: #{film_forward.1} parent=1 // pred_check
      _
    $region39: #{film_forward.1} parent=1 // pred_check_branch
      %1599 = sbr.rel (0) target = $region41
    $region40: #{film_forward.1} parent=1 // pred_region
      %1600 = dma.done [#allocation4], 64
    $region41: #{film_forward.1} parent=1 // pred_fallthru
      _
    %1601 = vsyncpa [#allocation3], 1
    %1602 = vsyncpa [#allocation6], 1
    %1603 = vsyncpa [#allocation9], 1
    %1604 = vsyncpa [#allocation4], 1

</llo_original>
